<compile_context>
chip_gen: v5e
topology: v5e:2x2
jax: 0.10.0
libtpu: 0.0.40
codegen_flags: <defaults>
</compile_context>

<pallas_src>
import functools

import jax
import jax.numpy as jnp
from jax.experimental import pallas as pl
from jax.experimental.pallas import tpu as pltpu

D_IN, D_H1, D_H2, D_OUT = 28 * 28, 512, 128, 10
D_OUT_PAD = 128          # lane-dense output width (slice back to D_OUT in wrapper)
LN_EPS = 1e-5            # torch.nn.LayerNorm default


def _round_up(n, m):
    return ((n + m - 1) // m) * m


def _num_tensorcores():
    """TensorCores per chip (trace-time Python). v7x/v4/v5p have 2; v5e/v6e 1."""
    try:
        kind = (getattr(jax.devices()[0], "device_kind", "") or "").lower()
        if "v7" in kind or "v4" in kind or "v5p" in kind:
            return 2
    except Exception:
        pass
    return 1


def _layernorm(h, gamma, beta):
    # Single-pass statistics: one pair of reductions (E[x], E[x^2]) instead of
    # two passes over (h - mu). var = E[x^2] - mu^2 (biased, matches torch).
    mu = jnp.mean(h, axis=-1, keepdims=True)
    ms = jnp.mean(h * h, axis=-1, keepdims=True)
    var = ms - mu * mu
    return (h - mu) * jax.lax.rsqrt(var + LN_EPS) * gamma + beta


def mlp_kernel(x_ref,
               w1_ref, b1_ref, g1_ref, be1_ref,
               w2_ref, b2_ref, g2_ref, be2_ref,
               w3_ref, b3_ref,
               o_ref):
    # fc1: cast the f32 x tile to bf16 on the VPU (DMA'd once as f32), then
    # bf16 x bf16 -> f32 acc on the MXU -> LayerNorm -> ReLU (f32).
    h1 = jnp.dot(x_ref[...].astype(jnp.bfloat16), w1_ref[...],
                 preferred_element_type=jnp.float32) + b1_ref[...]
    h1 = _layernorm(h1, g1_ref[...], be1_ref[...])
    h1 = jnp.maximum(h1, 0.0)

    # fc2 -> LayerNorm -> ReLU
    h2 = jnp.dot(h1.astype(jnp.bfloat16), w2_ref[...],
                 preferred_element_type=jnp.float32) + b2_ref[...]
    h2 = _layernorm(h2, g2_ref[...], be2_ref[...])
    h2 = jnp.maximum(h2, 0.0)

    # fc3 (no activation), padded to 128 output lanes for unmasked bf16 stores
    out = jnp.dot(h2.astype(jnp.bfloat16), w3_ref[...],
                  preferred_element_type=jnp.float32) + b3_ref[...]
    o_ref[...] = out.astype(o_ref.dtype)


def prepare_params(params):
    """One-time prep: bf16 matmul weights, fc3 padded 10->128. Call once,
    outside the per-step forward, so no per-call astype/pad HBM passes."""
    (w1, b1, g1, be1, w2, b2, g2, be2, w3, b3) = params
    w1b = w1.astype(jnp.bfloat16)
    w2b = w2.astype(jnp.bfloat16)
    w3p = jnp.pad(w3, ((0, 0), (0, D_OUT_PAD - D_OUT))).astype(jnp.bfloat16)
    b3p = jnp.pad(b3, ((0, 0), (0, D_OUT_PAD - D_OUT)))
    return (w1b, b1, g1, be1, w2b, b2, g2, be2, w3p, b3p)


@functools.partial(jax.jit, static_argnames=("block_b",))
def mlp_forward(x, prepared_params, block_b=512):
    """x: any shape with trailing elements flattening to (B, 784); f32 logits out."""
    x2d = x.reshape(-1, D_IN)  # glue: same as torch x.view(-1, 28*28)
    B = x2d.shape[0]

    # Batch tile: large MXU/HBM-friendly default (512). Split the batch across
    # TensorCores only on multi-TC chips (v7x); on single-TC v5e/v6e one big
    # tile avoids extra grid steps (~0.35 us each) and pipeline ramp.
    num_tc = _num_tensorcores()
    if num_tc > 1:
        bb = min(block_b, max(16, _round_up(-(-B // num_tc), 16)))
    else:
        bb = min(block_b, max(16, _round_up(B, 16)))
    padded_B = _round_up(B, bb)
    if padded_B != B:
        x2d = jnp.pad(x2d, ((0, padded_B - B), (0, 0)))

    (w1b, b1, g1, be1, w2b, b2, g2, be2, w3p, b3p) = prepared_params

    # Full-extent (un-tiled) spec for a parameter broadcast to every grid step.
    def full_spec(shape):
        return pl.BlockSpec(shape, lambda i: (0,) * len(shape))

    grid = (padded_B // bb,)
    out = pl.pallas_call(
        mlp_kernel,
        out_shape=jax.ShapeDtypeStruct((padded_B, D_OUT_PAD), jnp.bfloat16),
        grid_spec=pltpu.PrefetchScalarGridSpec(
            num_scalar_prefetch=0,
            grid=grid,
            in_specs=[
                pl.BlockSpec((bb, D_IN), lambda i: (i, 0)),   # x tile (f32)
                full_spec(w1b.shape), full_spec(b1.shape),
                full_spec(g1.shape), full_spec(be1.shape),
                full_spec(w2b.shape), full_spec(b2.shape),
                full_spec(g2.shape), full_spec(be2.shape),
                full_spec(w3p.shape), full_spec(b3p.shape),
            ],
            out_specs=pl.BlockSpec((bb, D_OUT_PAD), lambda i: (i, 0)),
        ),
        compiler_params=pltpu.CompilerParams(
            dimension_semantics=("parallel",),
            vmem_limit_bytes=32 * 1024 * 1024),
    )(x2d, w1b, b1, g1, be1, w2b, b2, g2, be2, w3p, b3p)

    # Slice back to (B, 10) and return f32 logits (tiny cast, after the slice).
    return out[:B, :D_OUT].astype(jnp.float32)


def init_params(key):
    """Deterministic init matching nn.Linear / nn.LayerNorm shapes.

    Linear weights are stored transposed: (in, out). Biases and LayerNorm
    params are kept 2D (1, dim) for TPU-friendly layout. All f32.
    """
    ks = jax.random.split(key, 6)

    def linear(k, fan_in, fan_out):
        # PyTorch default: U(-1/sqrt(fan_in), 1/sqrt(fan_in))
        bound = 1.0 / jnp.sqrt(fan_in)
        kw, kb = jax.random.split(k)
        w = jax.random.uniform(kw, (fan_in, fan_out), jnp.float32, -bound, bound)
        b = jax.random.uniform(kb, (1, fan_out), jnp.float32, -bound, bound)
        return w, b

    w1, b1 = linear(ks[0], D_IN, D_H1)
    w2, b2 = linear(ks[1], D_H1, D_H2)
    w3, b3 = linear(ks[2], D_H2, D_OUT)
    g1 = jnp.ones((1, D_H1), jnp.float32)
    be1 = jnp.zeros((1, D_H1), jnp.float32)
    g2 = jnp.ones((1, D_H2), jnp.float32)
    be2 = jnp.zeros((1, D_H2), jnp.float32)
    return (w1, b1, g1, be1, w2, b2, g2, be2, w3, b3)


def mlp_reference(x, params):
    """Pure-JAX reference using the same bf16-input / f32-accum pattern.
    Note: bf16 matmuls deviate ~1e-2 from a true f32 torch MLP; intentional."""
    (w1, b1, g1, be1, w2, b2, g2, be2, w3, b3) = params
    h = x.reshape(-1, D_IN).astype(jnp.bfloat16)
    h = jnp.dot(h, w1.astype(jnp.bfloat16),
                preferred_element_type=jnp.float32) + b1
    h = jnp.maximum(_layernorm(h, g1, be1), 0.0)
    h = jnp.dot(h.astype(jnp.bfloat16), w2.astype(jnp.bfloat16),
                preferred_element_type=jnp.float32) + b2
    h = jnp.maximum(_layernorm(h, g2, be2), 0.0)
    return jnp.dot(h.astype(jnp.bfloat16), w3.astype(jnp.bfloat16),
                   preferred_element_type=jnp.float32) + b3


if __name__ == "__main__":
    key = jax.random.PRNGKey(0)
    k_x, k_p = jax.random.split(key)

    # Small MNIST-like batch: (B, 1, 28, 28) NCHW.
    x = jax.random.normal(k_x, (8, 1, 28, 28), jnp.float32)
    params = init_params(k_p)
    prepared = prepare_params(params)   # one-time weight cast/pad

    out = mlp_forward(x, prepared)
    out = jax.block_until_ready(out)

    ref = mlp_reference(x, params)
    assert out.shape == (8, D_OUT), out.shape
    assert jnp.allclose(out, ref, atol=2e-2, rtol=2e-2), \
        float(jnp.max(jnp.abs(out - ref)))

    # TODO(synk): evaluateZ (numpy eigendecomposition of z^T z) is host-side
    # analysis, not part of the forward pass, so it is not ported to Pallas.

    print("KERNEL_OK")
</pallas_src>

<mosaic_0001>
module attributes {stable_mosaic.version = 11 : i64} {
  func.func @mlp_kernel(%arg0: i32, %arg1: memref<16x784xf32, #tpu.memory_space<vmem>>, %arg2: memref<784x512xbf16, #tpu.memory_space<vmem>>, %arg3: memref<1x512xf32, #tpu.memory_space<vmem>>, %arg4: memref<1x512xf32, #tpu.memory_space<vmem>>, %arg5: memref<1x512xf32, #tpu.memory_space<vmem>>, %arg6: memref<512x128xbf16, #tpu.memory_space<vmem>>, %arg7: memref<1x128xf32, #tpu.memory_space<vmem>>, %arg8: memref<1x128xf32, #tpu.memory_space<vmem>>, %arg9: memref<1x128xf32, #tpu.memory_space<vmem>>, %arg10: memref<128x128xbf16, #tpu.memory_space<vmem>>, %arg11: memref<1x128xf32, #tpu.memory_space<vmem>>, %arg12: memref<16x128xbf16, #tpu.memory_space<vmem>>) attributes {dimension_semantics = [#tpu.dimension_semantics<parallel>], iteration_bounds = array<i64: 1>, scalar_prefetch = 0 : i64, scratch_operands = 0 : i64, tpu.core_type = #tpu.core_type<tc>, window_params = [{transform_indices = @transform_0, window_bounds = array<i64: 16, 784>}, {pipeline_mode = #tpu.pipeline_mode<synchronous>, transform_indices = @transform_1, window_bounds = array<i64: 784, 512>}, {pipeline_mode = #tpu.pipeline_mode<synchronous>, transform_indices = @transform_2, window_bounds = array<i64: 1, 512>}, {pipeline_mode = #tpu.pipeline_mode<synchronous>, transform_indices = @transform_3, window_bounds = array<i64: 1, 512>}, {pipeline_mode = #tpu.pipeline_mode<synchronous>, transform_indices = @transform_4, window_bounds = array<i64: 1, 512>}, {pipeline_mode = #tpu.pipeline_mode<synchronous>, transform_indices = @transform_5, window_bounds = array<i64: 512, 128>}, {pipeline_mode = #tpu.pipeline_mode<synchronous>, transform_indices = @transform_6, window_bounds = array<i64: 1, 128>}, {pipeline_mode = #tpu.pipeline_mode<synchronous>, transform_indices = @transform_7, window_bounds = array<i64: 1, 128>}, {pipeline_mode = #tpu.pipeline_mode<synchronous>, transform_indices = @transform_8, window_bounds = array<i64: 1, 128>}, {pipeline_mode = #tpu.pipeline_mode<synchronous>, transform_indices = @transform_9, window_bounds = array<i64: 128, 128>}, {pipeline_mode = #tpu.pipeline_mode<synchronous>, transform_indices = @transform_10, window_bounds = array<i64: 1, 128>}, {transform_indices = @transform_11, window_bounds = array<i64: 16, 128>}]} {
    %c0 = arith.constant 0 : index
    %c0_0 = arith.constant 0 : index
    %0 = vector.load %arg1[%c0, %c0_0] : memref<16x784xf32, #tpu.memory_space<vmem>>, vector<16x784xf32>
    %1 = arith.truncf %0 : vector<16x784xf32> to vector<16x784xbf16>
    %c0_1 = arith.constant 0 : index
    %c0_2 = arith.constant 0 : index
    %2 = vector.load %arg2[%c0_1, %c0_2] : memref<784x512xbf16, #tpu.memory_space<vmem>>, vector<784x512xbf16>
    %cst = arith.constant dense<0.000000e+00> : vector<16x512xf32>
    %3 = tpu.matmul %1, %2, %cst {dimension_numbers = #tpu.dot_dimension_numbers<[1], [0], [0], [1], [0, 0, 1, 1], [], []>} : vector<16x784xbf16>, vector<784x512xbf16>, vector<16x512xf32> -> vector<16x512xf32>
    %c0_3 = arith.constant 0 : index
    %c0_4 = arith.constant 0 : index
    %4 = vector.load %arg3[%c0_3, %c0_4] : memref<1x512xf32, #tpu.memory_space<vmem>>, vector<1x512xf32>
    %5 = vector.broadcast %4 : vector<1x512xf32> to vector<16x512xf32>
    %6 = arith.addf %3, %5 : vector<16x512xf32>
    %c0_5 = arith.constant 0 : index
    %c0_6 = arith.constant 0 : index
    %7 = vector.load %arg4[%c0_5, %c0_6] : memref<1x512xf32, #tpu.memory_space<vmem>>, vector<1x512xf32>
    %c0_7 = arith.constant 0 : index
    %c0_8 = arith.constant 0 : index
    %8 = vector.load %arg5[%c0_7, %c0_8] : memref<1x512xf32, #tpu.memory_space<vmem>>, vector<1x512xf32>
    %cst_9 = arith.constant dense<0.000000e+00> : vector<16xf32>
    %9 = vector.multi_reduction <add>, %6, %cst_9 [1] : vector<16x512xf32> to vector<16xf32>
    %10 = vector.shape_cast %9 : vector<16xf32> to vector<16x1xf32>
    %cst_10 = arith.constant 5.120000e+02 : f32
    %11 = vector.broadcast %cst_10 : f32 to vector<16x1xf32>
    %12 = arith.divf %10, %11 : vector<16x1xf32>
    %13 = arith.mulf %6, %6 : vector<16x512xf32>
    %cst_11 = arith.constant dense<0.000000e+00> : vector<16xf32>
    %14 = vector.multi_reduction <add>, %13, %cst_11 [1] : vector<16x512xf32> to vector<16xf32>
    %15 = vector.shape_cast %14 : vector<16xf32> to vector<16x1xf32>
    %cst_12 = arith.constant 5.120000e+02 : f32
    %16 = vector.broadcast %cst_12 : f32 to vector<16x1xf32>
    %17 = arith.divf %15, %16 : vector<16x1xf32>
    %18 = arith.mulf %12, %12 : vector<16x1xf32>
    %19 = arith.subf %17, %18 : vector<16x1xf32>
    %20 = vector.broadcast %12 : vector<16x1xf32> to vector<16x512xf32>
    %21 = arith.subf %6, %20 : vector<16x512xf32>
    %cst_13 = arith.constant 9.99999974E-6 : f32
    %22 = vector.broadcast %cst_13 : f32 to vector<16x1xf32>
    %23 = arith.addf %19, %22 : vector<16x1xf32>
    %24 = math.rsqrt %23 : vector<16x1xf32>
    %25 = vector.broadcast %24 : vector<16x1xf32> to vector<16x512xf32>
    %26 = arith.mulf %21, %25 : vector<16x512xf32>
    %27 = vector.broadcast %7 : vector<1x512xf32> to vector<16x512xf32>
    %28 = arith.mulf %26, %27 : vector<16x512xf32>
    %29 = vector.broadcast %8 : vector<1x512xf32> to vector<16x512xf32>
    %30 = arith.addf %28, %29 : vector<16x512xf32>
    %cst_14 = arith.constant 0.000000e+00 : f32
    %31 = vector.broadcast %cst_14 : f32 to vector<16x512xf32>
    %32 = arith.maximumf %30, %31 : vector<16x512xf32>
    %33 = arith.truncf %32 : vector<16x512xf32> to vector<16x512xbf16>
    %c0_15 = arith.constant 0 : index
    %c0_16 = arith.constant 0 : index
    %34 = vector.load %arg6[%c0_15, %c0_16] : memref<512x128xbf16, #tpu.memory_space<vmem>>, vector<512x128xbf16>
    %cst_17 = arith.constant dense<0.000000e+00> : vector<16x128xf32>
    %35 = tpu.matmul %33, %34, %cst_17 {dimension_numbers = #tpu.dot_dimension_numbers<[1], [0], [0], [1], [0, 0, 1, 1], [], []>} : vector<16x512xbf16>, vector<512x128xbf16>, vector<16x128xf32> -> vector<16x128xf32>
    %c0_18 = arith.constant 0 : index
    %c0_19 = arith.constant 0 : index
    %36 = vector.load %arg7[%c0_18, %c0_19] : memref<1x128xf32, #tpu.memory_space<vmem>>, vector<1x128xf32>
    %37 = vector.broadcast %36 : vector<1x128xf32> to vector<16x128xf32>
    %38 = arith.addf %35, %37 : vector<16x128xf32>
    %c0_20 = arith.constant 0 : index
    %c0_21 = arith.constant 0 : index
    %39 = vector.load %arg8[%c0_20, %c0_21] : memref<1x128xf32, #tpu.memory_space<vmem>>, vector<1x128xf32>
    %c0_22 = arith.constant 0 : index
    %c0_23 = arith.constant 0 : index
    %40 = vector.load %arg9[%c0_22, %c0_23] : memref<1x128xf32, #tpu.memory_space<vmem>>, vector<1x128xf32>
    %cst_24 = arith.constant dense<0.000000e+00> : vector<16xf32>
    %41 = vector.multi_reduction <add>, %38, %cst_24 [1] : vector<16x128xf32> to vector<16xf32>
    %42 = vector.shape_cast %41 : vector<16xf32> to vector<16x1xf32>
    %cst_25 = arith.constant 1.280000e+02 : f32
    %43 = vector.broadcast %cst_25 : f32 to vector<16x1xf32>
    %44 = arith.divf %42, %43 : vector<16x1xf32>
    %45 = arith.mulf %38, %38 : vector<16x128xf32>
    %cst_26 = arith.constant dense<0.000000e+00> : vector<16xf32>
    %46 = vector.multi_reduction <add>, %45, %cst_26 [1] : vector<16x128xf32> to vector<16xf32>
    %47 = vector.shape_cast %46 : vector<16xf32> to vector<16x1xf32>
    %cst_27 = arith.constant 1.280000e+02 : f32
    %48 = vector.broadcast %cst_27 : f32 to vector<16x1xf32>
    %49 = arith.divf %47, %48 : vector<16x1xf32>
    %50 = arith.mulf %44, %44 : vector<16x1xf32>
    %51 = arith.subf %49, %50 : vector<16x1xf32>
    %52 = vector.broadcast %44 : vector<16x1xf32> to vector<16x128xf32>
    %53 = arith.subf %38, %52 : vector<16x128xf32>
    %cst_28 = arith.constant 9.99999974E-6 : f32
    %54 = vector.broadcast %cst_28 : f32 to vector<16x1xf32>
    %55 = arith.addf %51, %54 : vector<16x1xf32>
    %56 = math.rsqrt %55 : vector<16x1xf32>
    %57 = vector.broadcast %56 : vector<16x1xf32> to vector<16x128xf32>
    %58 = arith.mulf %53, %57 : vector<16x128xf32>
    %59 = vector.broadcast %39 : vector<1x128xf32> to vector<16x128xf32>
    %60 = arith.mulf %58, %59 : vector<16x128xf32>
    %61 = vector.broadcast %40 : vector<1x128xf32> to vector<16x128xf32>
    %62 = arith.addf %60, %61 : vector<16x128xf32>
    %cst_29 = arith.constant 0.000000e+00 : f32
    %63 = vector.broadcast %cst_29 : f32 to vector<16x128xf32>
    %64 = arith.maximumf %62, %63 : vector<16x128xf32>
    %65 = arith.truncf %64 : vector<16x128xf32> to vector<16x128xbf16>
    %c0_30 = arith.constant 0 : index
    %c0_31 = arith.constant 0 : index
    %66 = vector.load %arg10[%c0_30, %c0_31] : memref<128x128xbf16, #tpu.memory_space<vmem>>, vector<128x128xbf16>
    %cst_32 = arith.constant dense<0.000000e+00> : vector<16x128xf32>
    %67 = tpu.matmul %65, %66, %cst_32 {dimension_numbers = #tpu.dot_dimension_numbers<[1], [0], [0], [1], [0, 0, 1, 1], [], []>} : vector<16x128xbf16>, vector<128x128xbf16>, vector<16x128xf32> -> vector<16x128xf32>
    %c0_33 = arith.constant 0 : index
    %c0_34 = arith.constant 0 : index
    %68 = vector.load %arg11[%c0_33, %c0_34] : memref<1x128xf32, #tpu.memory_space<vmem>>, vector<1x128xf32>
    %69 = vector.broadcast %68 : vector<1x128xf32> to vector<16x128xf32>
    %70 = arith.addf %67, %69 : vector<16x128xf32>
    %71 = arith.truncf %70 : vector<16x128xf32> to vector<16x128xbf16>
    %c0_35 = arith.constant 0 : index
    %c0_36 = arith.constant 0 : index
    %72 = vector.load %arg12[%c0_35, %c0_36] : memref<16x128xbf16, #tpu.memory_space<vmem>>, vector<16x128xbf16>
    tpu.vector_store %arg12[%c0_35, %c0_36], %71 {strides = array<i32>} : memref<16x128xbf16, #tpu.memory_space<vmem>>, vector<16x128xbf16>,
    return
  }
  func.func @transform_0(%arg0: i32) -> (i32, i32) {
    %c0_i32 = arith.constant 0 : i32
    %c0_i32_0 = arith.constant 0 : i32
    return %arg0, %c0_i32 : i32, i32
  }
  func.func @transform_1(%arg0: i32) -> (i32, i32) {
    %c0_i32 = arith.constant 0 : i32
    %c0_i32_0 = arith.constant 0 : i32
    %c0_i32_1 = arith.constant 0 : i32
    return %c0_i32, %c0_i32_0 : i32, i32
  }
  func.func @transform_2(%arg0: i32) -> (i32, i32) {
    %c0_i32 = arith.constant 0 : i32
    %c0_i32_0 = arith.constant 0 : i32
    %c0_i32_1 = arith.constant 0 : i32
    return %c0_i32, %c0_i32_0 : i32, i32
  }
  func.func @transform_3(%arg0: i32) -> (i32, i32) {
    %c0_i32 = arith.constant 0 : i32
    %c0_i32_0 = arith.constant 0 : i32
    %c0_i32_1 = arith.constant 0 : i32
    return %c0_i32, %c0_i32_0 : i32, i32
  }
  func.func @transform_4(%arg0: i32) -> (i32, i32) {
    %c0_i32 = arith.constant 0 : i32
    %c0_i32_0 = arith.constant 0 : i32
    %c0_i32_1 = arith.constant 0 : i32
    return %c0_i32, %c0_i32_0 : i32, i32
  }
  func.func @transform_5(%arg0: i32) -> (i32, i32) {
    %c0_i32 = arith.constant 0 : i32
    %c0_i32_0 = arith.constant 0 : i32
    %c0_i32_1 = arith.constant 0 : i32
    return %c0_i32, %c0_i32_0 : i32, i32
  }
  func.func @transform_6(%arg0: i32) -> (i32, i32) {
    %c0_i32 = arith.constant 0 : i32
    %c0_i32_0 = arith.constant 0 : i32
    %c0_i32_1 = arith.constant 0 : i32
    return %c0_i32, %c0_i32_0 : i32, i32
  }
  func.func @transform_7(%arg0: i32) -> (i32, i32) {
    %c0_i32 = arith.constant 0 : i32
    %c0_i32_0 = arith.constant 0 : i32
    %c0_i32_1 = arith.constant 0 : i32
    return %c0_i32, %c0_i32_0 : i32, i32
  }
  func.func @transform_8(%arg0: i32) -> (i32, i32) {
    %c0_i32 = arith.constant 0 : i32
    %c0_i32_0 = arith.constant 0 : i32
    %c0_i32_1 = arith.constant 0 : i32
    return %c0_i32, %c0_i32_0 : i32, i32
  }
  func.func @transform_9(%arg0: i32) -> (i32, i32) {
    %c0_i32 = arith.constant 0 : i32
    %c0_i32_0 = arith.constant 0 : i32
    %c0_i32_1 = arith.constant 0 : i32
    return %c0_i32, %c0_i32_0 : i32, i32
  }
  func.func @transform_10(%arg0: i32) -> (i32, i32) {
    %c0_i32 = arith.constant 0 : i32
    %c0_i32_0 = arith.constant 0 : i32
    %c0_i32_1 = arith.constant 0 : i32
    return %c0_i32, %c0_i32_0 : i32, i32
  }
  func.func @transform_11(%arg0: i32) -> (i32, i32) {
    %c0_i32 = arith.constant 0 : i32
    %c0_i32_0 = arith.constant 0 : i32
    return %arg0, %c0_i32 : i32, i32
  }
}

</mosaic_0001>

<llo_original>
// kernel: mlp_forward.1
$region0: #{mlp_forward.1}
  #allocation0 [shape = 'u32[]', space=smem, size = 0x4, offset = 0x4, fixed_abs, tag = 'smem constant byte address 0x4 - core index']
  #allocation1 [shape = 'u32[72,128]{1,0:T(1,128)}', space=vmem, size = 0x9000, scoped, tag = 'internal scratch']
  %s0 = inlined_call_operand.vmem [shape: f32[16,784], index: 0, kind: input, shape index: {}]
  %s1 = inlined_call_operand.hbm [shape: bf16[784,512], index: 1, kind: input, shape index: {}]
  %s2 = inlined_call_operand.vmem [shape: f32[1,512], index: 2, kind: input, shape index: {}]
  %s3 = inlined_call_operand.vmem [shape: f32[1,512], index: 3, kind: input, shape index: {}]
  %s4 = inlined_call_operand.vmem [shape: f32[1,512], index: 4, kind: input, shape index: {}]
  %s5 = inlined_call_operand.vmem [shape: bf16[512,128], index: 5, kind: input, shape index: {}]
  %s6 = inlined_call_operand.vmem [shape: f32[1,128], index: 6, kind: input, shape index: {}]
  %s7 = inlined_call_operand.vmem [shape: f32[1,128], index: 7, kind: input, shape index: {}]
  %s8 = inlined_call_operand.vmem [shape: f32[1,128], index: 8, kind: input, shape index: {}]
  %s9 = inlined_call_operand.vmem [shape: bf16[128,128], index: 9, kind: input, shape index: {}]
  %s10 = inlined_call_operand.vmem [shape: f32[1,128], index: 10, kind: input, shape index: {}]
  %s11 = inlined_call_operand.vmem [shape: bf16[16,128], index: 11, kind: output, shape index: {}]
  %s12 = sld [smem:[#allocation0]]
  $region58: #{mlp_forward.1} parent=0
    _
  %s14 = ssub.s32 1, %s12
  %s15 = scalar_select 0, %s14, %s12
  $region1: #{mlp_forward.1} parent=0
    #allocation2 [shape = 'u8[802816]{0}', space=vmem, size = 0xc4000, scoped, tag = 'input window, operand 1, single buffered']
    #allocation3 [shape = 's32[1]{0}', space=sflag, size = 0x4, scoped, tag = 'scoped memory for mlp_forward.1']
    %16 = vsyncpa [#allocation3], 0
    // Predicated region
    $region2: #{mlp_forward.1} parent=1 // pred_check
      _
    $region3: #{mlp_forward.1} parent=1 // pred_check_branch
      %18 = sbr.rel (0) target = $region5
    $region4: #{mlp_forward.1} parent=1 // pred_region
      _
    $region5: #{mlp_forward.1} parent=1 // pred_fallthru
      _
    // Predicated region
    $region6: #{mlp_forward.1} parent=1 // pred_check
      _
    $region7: #{mlp_forward.1} parent=1 // pred_check_branch
      %20 = sbr.rel (0) target = $region9
    $region8: #{mlp_forward.1} parent=1 // pred_region
      %22 = vsyncadd [#allocation3], 0
      %s23 = sshll.u32 %s1, 4
      %s24 = int_to_ptr.hbm [resolvable:$true] %s23
      %s25 = sshll.u32 [#allocation2], 4
      %s26 = int_to_ptr.vmem [resolvable:$true] %s25
      %31 = dma.hbm_to_vmem [thread:$0]  %s24, 25088, %s26, [#allocation3], 256, 256, 16
    $region9: #{mlp_forward.1} parent=1 // pred_fallthru
      _
    // Predicated region
    $region10: #{mlp_forward.1} parent=1 // pred_check
      _
    $region11: #{mlp_forward.1} parent=1 // pred_check_branch
      %33 = sbr.rel (0) target = $region13
    $region12: #{mlp_forward.1} parent=1 // pred_region
      _
    $region13: #{mlp_forward.1} parent=1 // pred_fallthru
      _
    // Predicated region
    $region14: #{mlp_forward.1} parent=1 // pred_check
      _
    $region15: #{mlp_forward.1} parent=1 // pred_check_branch
      %35 = sbr.rel (0) target = $region17
    $region16: #{mlp_forward.1} parent=1 // pred_region
      _
    $region17: #{mlp_forward.1} parent=1 // pred_fallthru
      _
    // Predicated region
    $region18: #{mlp_forward.1} parent=1 // pred_check
      _
    $region19: #{mlp_forward.1} parent=1 // pred_check_branch
      %37 = sbr.rel (0) target = $region21
    $region20: #{mlp_forward.1} parent=1 // pred_region
      _
    $region21: #{mlp_forward.1} parent=1 // pred_fallthru
      _
    // Predicated region
    $region22: #{mlp_forward.1} parent=1 // pred_check
      _
    $region23: #{mlp_forward.1} parent=1 // pred_check_branch
      %39 = sbr.rel (0) target = $region25
    $region24: #{mlp_forward.1} parent=1 // pred_region
      _
    $region25: #{mlp_forward.1} parent=1 // pred_fallthru
      _
    // Predicated region
    $region26: #{mlp_forward.1} parent=1 // pred_check
      _
    $region27: #{mlp_forward.1} parent=1 // pred_check_branch
      %41 = sbr.rel (0) target = $region29
    $region28: #{mlp_forward.1} parent=1 // pred_region
      _
    $region29: #{mlp_forward.1} parent=1 // pred_fallthru
      _
    // Predicated region
    $region30: #{mlp_forward.1} parent=1 // pred_check
      _
    $region31: #{mlp_forward.1} parent=1 // pred_check_branch
      %43 = sbr.rel (0) target = $region33
    $region32: #{mlp_forward.1} parent=1 // pred_region
      _
    $region33: #{mlp_forward.1} parent=1 // pred_fallthru
      _
    // Predicated region
    $region34: #{mlp_forward.1} parent=1 // pred_check
      _
    $region35: #{mlp_forward.1} parent=1 // pred_check_branch
      %45 = sbr.rel (0) target = $region37
    $region36: #{mlp_forward.1} parent=1 // pred_region
      _
    $region37: #{mlp_forward.1} parent=1 // pred_fallthru
      _
    // Predicated region
    $region38: #{mlp_forward.1} parent=1 // pred_check
      _
    $region39: #{mlp_forward.1} parent=1 // pred_check_branch
      %47 = sbr.rel (0) target = $region41
    $region40: #{mlp_forward.1} parent=1 // pred_region
      _
    $region41: #{mlp_forward.1} parent=1 // pred_fallthru
      _
    // Predicated region
    $region42: #{mlp_forward.1} parent=1 // pred_check
      _
    $region43: #{mlp_forward.1} parent=1 // pred_check_branch
      %49 = sbr.rel (0) target = $region45
    $region44: #{mlp_forward.1} parent=1 // pred_region
      _
    $region45: #{mlp_forward.1} parent=1 // pred_fallthru
      _
    // Predicated region
    $region46: #{mlp_forward.1} parent=1 // pred_check
      _
    $region47: #{mlp_forward.1} parent=1 // pred_check_branch
      %51 = sbr.rel (0) target = $region49
    $region48: #{mlp_forward.1} parent=1 // pred_region
      %53 = dma.done [#allocation3], 25088
    $region49: #{mlp_forward.1} parent=1 // pred_fallthru
      _
    %v55 = vld [vmem:[%s0] sm:$0xff]
    %v56 = vld [vmem:[%s0 + $0x8] sm:$0xff]
    %v57 = vld [vmem:[%s0 + $0x10] sm:$0xff]
    %v58 = vld [vmem:[%s0 + $0x18] sm:$0xff]
    %v59 = vld [vmem:[%s0 + $0x20] sm:$0xff]
    %v60 = vld [vmem:[%s0 + $0x28] sm:$0xff]
    %v61 = vld [vmem:[%s0 + $0x30] sm:$0xff]
    %v62 = vld [vmem:[%s0 + $0x38] sm:$0xff]
    %v63 = vld [vmem:[%s0 + $0x40] sm:$0xff]
    %v64 = vld [vmem:[%s0 + $0x48] sm:$0xff]
    %v65 = vld [vmem:[%s0 + $0x50] sm:$0xff]
    %v66 = vld [vmem:[%s0 + $0x58] sm:$0xff]
    %v67 = vld [vmem:[%s0 + $0x60] sm:$0xff]
    %v68 = vld [vmem:[%s0 + $0x68] sm:$0xff]
    %v69 = vpack.c.bf16 %v62, %v55
    %v70 = vpack.c.bf16 %v63, %v56
    %v71 = vpack.c.bf16 %v64, %v57
    %v72 = vpack.c.bf16 %v65, %v58
    %v73 = vpack.c.bf16 %v66, %v59
    %v74 = vpack.c.bf16 %v67, %v60
    %v75 = vpack.c.bf16 %v68, %v61
    %v76 = vld [vmem:[#allocation2] sm:$0xff]
    %v77 = vld [vmem:[#allocation2 + $0x8] sm:$0xff]
    %v78 = vld [vmem:[#allocation2 + $0x10] sm:$0xff]
    %v79 = vld [vmem:[#allocation2 + $0x18] sm:$0xff]
    %v80 = vld [vmem:[#allocation2 + $0x20] sm:$0xff]
    %v81 = vld [vmem:[#allocation2 + $0x28] sm:$0xff]
    %v82 = vld [vmem:[#allocation2 + $0x30] sm:$0xff]
    %v83 = vld [vmem:[#allocation2 + $0x38] sm:$0xff]
    %v84 = vld [vmem:[#allocation2 + $0x40] sm:$0xff]
    %v85 = vld [vmem:[#allocation2 + $0x48] sm:$0xff]
    %v86 = vld [vmem:[#allocation2 + $0x50] sm:$0xff]
    %v87 = vld [vmem:[#allocation2 + $0x58] sm:$0xff]
    %v88 = vld [vmem:[#allocation2 + $0x60] sm:$0xff]
    %v89 = vld [vmem:[#allocation2 + $0x68] sm:$0xff]
    %v90 = vld [vmem:[#allocation2 + $0x70] sm:$0xff]
    %v91 = vld [vmem:[#allocation2 + $0x78] sm:$0xff]
    %v92 = vld [vmem:[#allocation2 + $0x80] sm:$0xff]
    %v93 = vld [vmem:[#allocation2 + $0x88] sm:$0xff]
    %v94 = vld [vmem:[#allocation2 + $0x90] sm:$0xff]
    %v95 = vld [vmem:[#allocation2 + $0x98] sm:$0xff]
    %v96 = vld [vmem:[#allocation2 + $0xa0] sm:$0xff]
    %v97 = vld [vmem:[#allocation2 + $0xa8] sm:$0xff]
    %v98 = vld [vmem:[#allocation2 + $0xb0] sm:$0xff]
    %v99 = vld [vmem:[#allocation2 + $0xb8] sm:$0xff]
    %v100 = vld [vmem:[#allocation2 + $0xc0] sm:$0xff]
    %v101 = vld [vmem:[#allocation2 + $0xc8] sm:$0xff]
    %v102 = vld [vmem:[#allocation2 + $0xd0] sm:$0xff]
    %v103 = vld [vmem:[#allocation2 + $0xd8] sm:$0xff]
    %v104 = vld [vmem:[#allocation2 + $0xe0] sm:$0xff]
    %v105 = vld [vmem:[#allocation2 + $0xe8] sm:$0xff]
    %v106 = vld [vmem:[#allocation2 + $0xf0] sm:$0xff]
    %v107 = vld [vmem:[#allocation2 + $0xf8] sm:$0xff]
    %v108 = vld [vmem:[#allocation2 + $0x100] sm:$0xff]
    %v109 = vld [vmem:[#allocation2 + $0x108] sm:$0xff]
    %v110 = vld [vmem:[#allocation2 + $0x110] sm:$0xff]
    %v111 = vld [vmem:[#allocation2 + $0x118] sm:$0xff]
    %v112 = vld [vmem:[#allocation2 + $0x120] sm:$0xff]
    %v113 = vld [vmem:[#allocation2 + $0x128] sm:$0xff]
    %v114 = vld [vmem:[#allocation2 + $0x130] sm:$0xff]
    %v115 = vld [vmem:[#allocation2 + $0x138] sm:$0xff]
    %v116 = vld [vmem:[#allocation2 + $0x140] sm:$0xff]
    %v117 = vld [vmem:[#allocation2 + $0x148] sm:$0xff]
    %v118 = vld [vmem:[#allocation2 + $0x150] sm:$0xff]
    %v119 = vld [vmem:[#allocation2 + $0x158] sm:$0xff]
    %v120 = vld [vmem:[#allocation2 + $0x160] sm:$0xff]
    %v121 = vld [vmem:[#allocation2 + $0x168] sm:$0xff]
    %v122 = vld [vmem:[#allocation2 + $0x170] sm:$0xff]
    %v123 = vld [vmem:[#allocation2 + $0x178] sm:$0xff]
    %v124 = vld [vmem:[#allocation2 + $0x180] sm:$0xff]
    %v125 = vld [vmem:[#allocation2 + $0x188] sm:$0xff]
    %v126 = vld [vmem:[#allocation2 + $0x190] sm:$0xff]
    %v127 = vld [vmem:[#allocation2 + $0x198] sm:$0xff]
    %v128 = vld [vmem:[#allocation2 + $0x1a0] sm:$0xff]
    %v129 = vld [vmem:[#allocation2 + $0x1a8] sm:$0xff]
    %v130 = vld [vmem:[#allocation2 + $0x1b0] sm:$0xff]
    %v131 = vld [vmem:[#allocation2 + $0x1b8] sm:$0xff]
    %v132 = vld [vmem:[#allocation2 + $0x1c0] sm:$0xff]
    %v133 = vld [vmem:[#allocation2 + $0x1c8] sm:$0xff]
    %v134 = vld [vmem:[#allocation2 + $0x1d0] sm:$0xff]
    %v135 = vld [vmem:[#allocation2 + $0x1d8] sm:$0xff]
    %v136 = vld [vmem:[#allocation2 + $0x1e0] sm:$0xff]
    %v137 = vld [vmem:[#allocation2 + $0x1e8] sm:$0xff]
    %v138 = vld [vmem:[#allocation2 + $0x1f0] sm:$0xff]
    %v139 = vld [vmem:[#allocation2 + $0x1f8] sm:$0xff]
    %v140 = vld [vmem:[#allocation2 + $0x200] sm:$0xff]
    %v141 = vld [vmem:[#allocation2 + $0x208] sm:$0xff]
    %v142 = vld [vmem:[#allocation2 + $0x210] sm:$0xff]
    %v143 = vld [vmem:[#allocation2 + $0x218] sm:$0xff]
    %v144 = vld [vmem:[#allocation2 + $0x220] sm:$0xff]
    %v145 = vld [vmem:[#allocation2 + $0x228] sm:$0xff]
    %v146 = vld [vmem:[#allocation2 + $0x230] sm:$0xff]
    %v147 = vld [vmem:[#allocation2 + $0x238] sm:$0xff]
    %v148 = vld [vmem:[#allocation2 + $0x240] sm:$0xff]
    %v149 = vld [vmem:[#allocation2 + $0x248] sm:$0xff]
    %v150 = vld [vmem:[#allocation2 + $0x250] sm:$0xff]
    %v151 = vld [vmem:[#allocation2 + $0x258] sm:$0xff]
    %v152 = vld [vmem:[#allocation2 + $0x260] sm:$0xff]
    %v153 = vld [vmem:[#allocation2 + $0x268] sm:$0xff]
    %v154 = vld [vmem:[#allocation2 + $0x270] sm:$0xff]
    %v155 = vld [vmem:[#allocation2 + $0x278] sm:$0xff]
    %v156 = vld [vmem:[#allocation2 + $0x280] sm:$0xff]
    %v157 = vld [vmem:[#allocation2 + $0x288] sm:$0xff]
    %v158 = vld [vmem:[#allocation2 + $0x290] sm:$0xff]
    %v159 = vld [vmem:[#allocation2 + $0x298] sm:$0xff]
    %v160 = vld [vmem:[#allocation2 + $0x2a0] sm:$0xff]
    %v161 = vld [vmem:[#allocation2 + $0x2a8] sm:$0xff]
    %v162 = vld [vmem:[#allocation2 + $0x2b0] sm:$0xff]
    %v163 = vld [vmem:[#allocation2 + $0x2b8] sm:$0xff]
    %v164 = vld [vmem:[#allocation2 + $0x2c0] sm:$0xff]
    %v165 = vld [vmem:[#allocation2 + $0x2c8] sm:$0xff]
    %v166 = vld [vmem:[#allocation2 + $0x2d0] sm:$0xff]
    %v167 = vld [vmem:[#allocation2 + $0x2d8] sm:$0xff]
    %v168 = vld [vmem:[#allocation2 + $0x2e0] sm:$0xff]
    %v169 = vld [vmem:[#allocation2 + $0x2e8] sm:$0xff]
    %v170 = vld [vmem:[#allocation2 + $0x2f0] sm:$0xff]
    %v171 = vld [vmem:[#allocation2 + $0x2f8] sm:$0xff]
    %v172 = vld [vmem:[#allocation2 + $0x300] sm:$0xff]
    %v173 = vld [vmem:[#allocation2 + $0x308] sm:$0xff]
    %v174 = vld [vmem:[#allocation2 + $0x310] sm:$0xff]
    %v175 = vld [vmem:[#allocation2 + $0x318] sm:$0xff]
    %v176 = vld [vmem:[#allocation2 + $0x320] sm:$0xff]
    %v177 = vld [vmem:[#allocation2 + $0x328] sm:$0xff]
    %v178 = vld [vmem:[#allocation2 + $0x330] sm:$0xff]
    %v179 = vld [vmem:[#allocation2 + $0x338] sm:$0xff]
    %v180 = vld [vmem:[#allocation2 + $0x340] sm:$0xff]
    %v181 = vld [vmem:[#allocation2 + $0x348] sm:$0xff]
    %v182 = vld [vmem:[#allocation2 + $0x350] sm:$0xff]
    %v183 = vld [vmem:[#allocation2 + $0x358] sm:$0xff]
    %v184 = vld [vmem:[#allocation2 + $0x360] sm:$0xff]
    %v185 = vld [vmem:[#allocation2 + $0x368] sm:$0xff]
    %v186 = vld [vmem:[#allocation2 + $0x370] sm:$0xff]
    %v187 = vld [vmem:[#allocation2 + $0x378] sm:$0xff]
    %v188 = vld [vmem:[#allocation2 + $0x380] sm:$0xff]
    %v189 = vld [vmem:[#allocation2 + $0x388] sm:$0xff]
    %v190 = vld [vmem:[#allocation2 + $0x390] sm:$0xff]
    %v191 = vld [vmem:[#allocation2 + $0x398] sm:$0xff]
    %v192 = vld [vmem:[#allocation2 + $0x3a0] sm:$0xff]
    %v193 = vld [vmem:[#allocation2 + $0x3a8] sm:$0xff]
    %v194 = vld [vmem:[#allocation2 + $0x3b0] sm:$0xff]
    %v195 = vld [vmem:[#allocation2 + $0x3b8] sm:$0xff]
    %v196 = vld [vmem:[#allocation2 + $0x3c0] sm:$0xff]
    %v197 = vld [vmem:[#allocation2 + $0x3c8] sm:$0xff]
    %v198 = vld [vmem:[#allocation2 + $0x3d0] sm:$0xff]
    %v199 = vld [vmem:[#allocation2 + $0x3d8] sm:$0xff]
    %v200 = vld [vmem:[#allocation2 + $0x3e0] sm:$0xff]
    %v201 = vld [vmem:[#allocation2 + $0x3e8] sm:$0xff]
    %v202 = vld [vmem:[#allocation2 + $0x3f0] sm:$0xff]
    %v203 = vld [vmem:[#allocation2 + $0x3f8] sm:$0xff]
    %v204 = vld [vmem:[#allocation2 + $0x400] sm:$0xff]
    %v205 = vld [vmem:[#allocation2 + $0x408] sm:$0xff]
    %v206 = vld [vmem:[#allocation2 + $0x410] sm:$0xff]
    %v207 = vld [vmem:[#allocation2 + $0x418] sm:$0xff]
    %v208 = vld [vmem:[#allocation2 + $0x420] sm:$0xff]
    %v209 = vld [vmem:[#allocation2 + $0x428] sm:$0xff]
    %v210 = vld [vmem:[#allocation2 + $0x430] sm:$0xff]
    %v211 = vld [vmem:[#allocation2 + $0x438] sm:$0xff]
    %v212 = vld [vmem:[#allocation2 + $0x440] sm:$0xff]
    %v213 = vld [vmem:[#allocation2 + $0x448] sm:$0xff]
    %v214 = vld [vmem:[#allocation2 + $0x450] sm:$0xff]
    %v215 = vld [vmem:[#allocation2 + $0x458] sm:$0xff]
    %v216 = vld [vmem:[#allocation2 + $0x460] sm:$0xff]
    %v217 = vld [vmem:[#allocation2 + $0x468] sm:$0xff]
    %v218 = vld [vmem:[#allocation2 + $0x470] sm:$0xff]
    %v219 = vld [vmem:[#allocation2 + $0x478] sm:$0xff]
    %v220 = vld [vmem:[#allocation2 + $0x480] sm:$0xff]
    %v221 = vld [vmem:[#allocation2 + $0x488] sm:$0xff]
    %v222 = vld [vmem:[#allocation2 + $0x490] sm:$0xff]
    %v223 = vld [vmem:[#allocation2 + $0x498] sm:$0xff]
    %v224 = vld [vmem:[#allocation2 + $0x4a0] sm:$0xff]
    %v225 = vld [vmem:[#allocation2 + $0x4a8] sm:$0xff]
    %v226 = vld [vmem:[#allocation2 + $0x4b0] sm:$0xff]
    %v227 = vld [vmem:[#allocation2 + $0x4b8] sm:$0xff]
    %v228 = vld [vmem:[#allocation2 + $0x4c0] sm:$0xff]
    %v229 = vld [vmem:[#allocation2 + $0x4c8] sm:$0xff]
    %v230 = vld [vmem:[#allocation2 + $0x4d0] sm:$0xff]
    %v231 = vld [vmem:[#allocation2 + $0x4d8] sm:$0xff]
    %v232 = vld [vmem:[#allocation2 + $0x4e0] sm:$0xff]
    %v233 = vld [vmem:[#allocation2 + $0x4e8] sm:$0xff]
    %v234 = vld [vmem:[#allocation2 + $0x4f0] sm:$0xff]
    %v235 = vld [vmem:[#allocation2 + $0x4f8] sm:$0xff]
    %v236 = vld [vmem:[#allocation2 + $0x500] sm:$0xff]
    %v237 = vld [vmem:[#allocation2 + $0x508] sm:$0xff]
    %v238 = vld [vmem:[#allocation2 + $0x510] sm:$0xff]
    %v239 = vld [vmem:[#allocation2 + $0x518] sm:$0xff]
    %v240 = vld [vmem:[#allocation2 + $0x520] sm:$0xff]
    %v241 = vld [vmem:[#allocation2 + $0x528] sm:$0xff]
    %v242 = vld [vmem:[#allocation2 + $0x530] sm:$0xff]
    %v243 = vld [vmem:[#allocation2 + $0x538] sm:$0xff]
    %v244 = vld [vmem:[#allocation2 + $0x540] sm:$0xff]
    %v245 = vld [vmem:[#allocation2 + $0x548] sm:$0xff]
    %v246 = vld [vmem:[#allocation2 + $0x550] sm:$0xff]
    %v247 = vld [vmem:[#allocation2 + $0x558] sm:$0xff]
    %v248 = vld [vmem:[#allocation2 + $0x560] sm:$0xff]
    %v249 = vld [vmem:[#allocation2 + $0x568] sm:$0xff]
    %v250 = vld [vmem:[#allocation2 + $0x570] sm:$0xff]
    %v251 = vld [vmem:[#allocation2 + $0x578] sm:$0xff]
    %v252 = vld [vmem:[#allocation2 + $0x580] sm:$0xff]
    %v253 = vld [vmem:[#allocation2 + $0x588] sm:$0xff]
    %v254 = vld [vmem:[#allocation2 + $0x590] sm:$0xff]
    %v255 = vld [vmem:[#allocation2 + $0x598] sm:$0xff]
    %v256 = vld [vmem:[#allocation2 + $0x5a0] sm:$0xff]
    %v257 = vld [vmem:[#allocation2 + $0x5a8] sm:$0xff]
    %v258 = vld [vmem:[#allocation2 + $0x5b0] sm:$0xff]
    %v259 = vld [vmem:[#allocation2 + $0x5b8] sm:$0xff]
    %v260 = vld [vmem:[#allocation2 + $0x5c0] sm:$0xff]
    %v261 = vld [vmem:[#allocation2 + $0x5c8] sm:$0xff]
    %v262 = vld [vmem:[#allocation2 + $0x5d0] sm:$0xff]
    %v263 = vld [vmem:[#allocation2 + $0x5d8] sm:$0xff]
    %v264 = vld [vmem:[#allocation2 + $0x5e0] sm:$0xff]
    %v265 = vld [vmem:[#allocation2 + $0x5e8] sm:$0xff]
    %v266 = vld [vmem:[#allocation2 + $0x5f0] sm:$0xff]
    %v267 = vld [vmem:[#allocation2 + $0x5f8] sm:$0xff]
    %v268 = vld [vmem:[#allocation2 + $0x600] sm:$0xff]
    %v269 = vld [vmem:[#allocation2 + $0x608] sm:$0xff]
    %v270 = vld [vmem:[#allocation2 + $0x610] sm:$0xff]
    %v271 = vld [vmem:[#allocation2 + $0x618] sm:$0xff]
    %v272 = vld [vmem:[%s2] sm:$0xf]
    %v274 = vperm.slane %v272, 0
    %v275 = vperm.slane %v272, 1
    %v276 = vperm.slane %v272, 2
    %v277 = vperm.slane %v272, 3
    %v478 = vunpack.c.l.b16 %v76
    %v479 = vunpack.c.h.b16 %v76
    %v480 = vunpack.c.l.b16 %v77
    %v481 = vunpack.c.h.b16 %v77
    %v482 = vunpack.c.l.b16 %v78
    %v483 = vunpack.c.h.b16 %v78
    %v484 = vunpack.c.l.b16 %v79
    %v485 = vunpack.c.h.b16 %v79
    %v486 = vunpack.c.l.b16 %v80
    %v487 = vunpack.c.h.b16 %v80
    %v488 = vunpack.c.l.b16 %v81
    %v489 = vunpack.c.h.b16 %v81
    %v490 = vunpack.c.l.b16 %v82
    %v491 = vunpack.c.h.b16 %v82
    %v492 = vunpack.c.l.b16 %v83
    %v493 = vunpack.c.h.b16 %v83
    %v494 = vunpack.c.l.b16 %v84
    %v495 = vunpack.c.h.b16 %v84
    %v496 = vunpack.c.l.b16 %v85
    %v497 = vunpack.c.h.b16 %v85
    %v498 = vunpack.c.l.b16 %v86
    %v499 = vunpack.c.h.b16 %v86
    %v500 = vunpack.c.l.b16 %v87
    %v501 = vunpack.c.h.b16 %v87
    %v502 = vunpack.c.l.b16 %v88
    %v503 = vunpack.c.h.b16 %v88
    %v504 = vunpack.c.l.b16 %v89
    %v505 = vunpack.c.h.b16 %v89
    %v506 = vunpack.c.l.b16 %v90
    %v507 = vunpack.c.h.b16 %v90
    %v508 = vunpack.c.l.b16 %v91
    %v509 = vunpack.c.h.b16 %v91
    %v510 = vunpack.c.l.b16 %v92
    %v511 = vunpack.c.h.b16 %v92
    %v512 = vunpack.c.l.b16 %v93
    %v513 = vunpack.c.h.b16 %v93
    %v514 = vunpack.c.l.b16 %v94
    %v515 = vunpack.c.h.b16 %v94
    %v516 = vunpack.c.l.b16 %v95
    %v517 = vunpack.c.h.b16 %v95
    %v518 = vunpack.c.l.b16 %v96
    %v519 = vunpack.c.h.b16 %v96
    %v520 = vunpack.c.l.b16 %v97
    %v521 = vunpack.c.h.b16 %v97
    %v522 = vunpack.c.l.b16 %v98
    %v523 = vunpack.c.h.b16 %v98
    %v524 = vunpack.c.l.b16 %v99
    %v525 = vunpack.c.h.b16 %v99
    %v526 = vunpack.c.l.b16 %v100
    %v527 = vunpack.c.h.b16 %v100
    %v528 = vunpack.c.l.b16 %v101
    %v529 = vunpack.c.h.b16 %v101
    %v530 = vunpack.c.l.b16 %v102
    %v531 = vunpack.c.h.b16 %v102
    %v532 = vunpack.c.l.b16 %v103
    %v533 = vunpack.c.h.b16 %v103
    %v534 = vunpack.c.l.b16 %v104
    %v535 = vunpack.c.h.b16 %v104
    %v536 = vunpack.c.l.b16 %v105
    %v537 = vunpack.c.h.b16 %v105
    %v538 = vunpack.c.l.b16 %v106
    %v539 = vunpack.c.h.b16 %v106
    %v540 = vunpack.c.l.b16 %v107
    %v541 = vunpack.c.h.b16 %v107
    %v542 = vunpack.c.l.b16 %v108
    %v543 = vunpack.c.h.b16 %v108
    %v544 = vunpack.c.l.b16 %v109
    %v545 = vunpack.c.h.b16 %v109
    %v546 = vunpack.c.l.b16 %v110
    %v547 = vunpack.c.h.b16 %v110
    %v548 = vunpack.c.l.b16 %v111
    %v549 = vunpack.c.h.b16 %v111
    %v550 = vunpack.c.l.b16 %v112
    %v551 = vunpack.c.h.b16 %v112
    %v552 = vunpack.c.l.b16 %v113
    %v553 = vunpack.c.h.b16 %v113
    %v554 = vunpack.c.l.b16 %v114
    %v555 = vunpack.c.h.b16 %v114
    %v556 = vunpack.c.l.b16 %v115
    %v557 = vunpack.c.h.b16 %v115
    %v558 = vunpack.c.l.b16 %v116
    %v559 = vunpack.c.h.b16 %v116
    %v560 = vunpack.c.l.b16 %v117
    %v561 = vunpack.c.h.b16 %v117
    %v562 = vunpack.c.l.b16 %v118
    %v563 = vunpack.c.h.b16 %v118
    %v564 = vunpack.c.l.b16 %v119
    %v565 = vunpack.c.h.b16 %v119
    %v566 = vunpack.c.l.b16 %v120
    %v567 = vunpack.c.h.b16 %v120
    %v568 = vunpack.c.l.b16 %v121
    %v569 = vunpack.c.h.b16 %v121
    %v570 = vunpack.c.l.b16 %v122
    %v571 = vunpack.c.h.b16 %v122
    %v572 = vunpack.c.l.b16 %v123
    %v573 = vunpack.c.h.b16 %v123
    %v574 = vunpack.c.l.b16 %v124
    %v575 = vunpack.c.h.b16 %v124
    %v576 = vunpack.c.l.b16 %v125
    %v577 = vunpack.c.h.b16 %v125
    %v578 = vunpack.c.l.b16 %v126
    %v579 = vunpack.c.h.b16 %v126
    %v580 = vunpack.c.l.b16 %v127
    %v581 = vunpack.c.h.b16 %v127
    %v582 = vunpack.c.l.b16 %v128
    %v583 = vunpack.c.h.b16 %v128
    %v584 = vunpack.c.l.b16 %v129
    %v585 = vunpack.c.h.b16 %v129
    %v586 = vunpack.c.l.b16 %v130
    %v587 = vunpack.c.h.b16 %v130
    %v588 = vunpack.c.l.b16 %v131
    %v589 = vunpack.c.h.b16 %v131
    %v590 = vunpack.c.l.b16 %v132
    %v591 = vunpack.c.h.b16 %v132
    %v592 = vunpack.c.l.b16 %v133
    %v593 = vunpack.c.h.b16 %v133
    %v594 = vunpack.c.l.b16 %v134
    %v595 = vunpack.c.h.b16 %v134
    %v596 = vunpack.c.l.b16 %v135
    %v597 = vunpack.c.h.b16 %v135
    %v598 = vunpack.c.l.b16 %v136
    %v599 = vunpack.c.h.b16 %v136
    %v600 = vunpack.c.l.b16 %v137
    %v601 = vunpack.c.h.b16 %v137
    %v602 = vunpack.c.l.b16 %v138
    %v603 = vunpack.c.h.b16 %v138
    %v604 = vunpack.c.l.b16 %v139
    %v605 = vunpack.c.h.b16 %v139
    %v606 = vunpack.c.l.b16 %v140
    %v607 = vunpack.c.h.b16 %v140
    %v608 = vunpack.c.l.b16 %v141
    %v609 = vunpack.c.h.b16 %v141
    %v610 = vunpack.c.l.b16 %v142
    %v611 = vunpack.c.h.b16 %v142
    %v612 = vunpack.c.l.b16 %v143
    %v613 = vunpack.c.h.b16 %v143
    %v614 = vunpack.c.l.b16 %v144
    %v615 = vunpack.c.h.b16 %v144
    %v616 = vunpack.c.l.b16 %v145
    %v617 = vunpack.c.h.b16 %v145
    %v618 = vunpack.c.l.b16 %v146
    %v619 = vunpack.c.h.b16 %v146
    %v620 = vunpack.c.l.b16 %v147
    %v621 = vunpack.c.h.b16 %v147
    %v622 = vunpack.c.l.b16 %v148
    %v623 = vunpack.c.h.b16 %v148
    %v624 = vunpack.c.l.b16 %v149
    %v625 = vunpack.c.h.b16 %v149
    %v626 = vunpack.c.l.b16 %v150
    %v627 = vunpack.c.h.b16 %v150
    %v628 = vunpack.c.l.b16 %v151
    %v629 = vunpack.c.h.b16 %v151
    %v630 = vunpack.c.l.b16 %v152
    %v631 = vunpack.c.h.b16 %v152
    %v632 = vunpack.c.l.b16 %v153
    %v633 = vunpack.c.h.b16 %v153
    %v634 = vunpack.c.l.b16 %v154
    %v635 = vunpack.c.h.b16 %v154
    %v636 = vunpack.c.l.b16 %v155
    %v637 = vunpack.c.h.b16 %v155
    %v638 = vunpack.c.l.b16 %v156
    %v639 = vunpack.c.h.b16 %v156
    %v640 = vunpack.c.l.b16 %v157
    %v641 = vunpack.c.h.b16 %v157
    %v642 = vunpack.c.l.b16 %v158
    %v643 = vunpack.c.h.b16 %v158
    %v644 = vunpack.c.l.b16 %v159
    %v645 = vunpack.c.h.b16 %v159
    %v646 = vunpack.c.l.b16 %v160
    %v647 = vunpack.c.h.b16 %v160
    %v648 = vunpack.c.l.b16 %v161
    %v649 = vunpack.c.h.b16 %v161
    %v650 = vunpack.c.l.b16 %v162
    %v651 = vunpack.c.h.b16 %v162
    %v652 = vunpack.c.l.b16 %v163
    %v653 = vunpack.c.h.b16 %v163
    %v654 = vunpack.c.l.b16 %v164
    %v655 = vunpack.c.h.b16 %v164
    %v656 = vunpack.c.l.b16 %v165
    %v657 = vunpack.c.h.b16 %v165
    %v658 = vunpack.c.l.b16 %v166
    %v659 = vunpack.c.h.b16 %v166
    %v660 = vunpack.c.l.b16 %v167
    %v661 = vunpack.c.h.b16 %v167
    %v662 = vunpack.c.l.b16 %v168
    %v663 = vunpack.c.h.b16 %v168
    %v664 = vunpack.c.l.b16 %v169
    %v665 = vunpack.c.h.b16 %v169
    %v666 = vunpack.c.l.b16 %v170
    %v667 = vunpack.c.h.b16 %v170
    %v668 = vunpack.c.l.b16 %v171
    %v669 = vunpack.c.h.b16 %v171
    %v670 = vunpack.c.l.b16 %v172
    %v671 = vunpack.c.h.b16 %v172
    %v672 = vunpack.c.l.b16 %v173
    %v673 = vunpack.c.h.b16 %v173
    %v674 = vunpack.c.l.b16 %v174
    %v675 = vunpack.c.h.b16 %v174
    %v676 = vunpack.c.l.b16 %v175
    %v677 = vunpack.c.h.b16 %v175
    %v678 = vunpack.c.l.b16 %v176
    %v679 = vunpack.c.h.b16 %v176
    %v680 = vunpack.c.l.b16 %v177
    %v681 = vunpack.c.h.b16 %v177
    %v682 = vunpack.c.l.b16 %v178
    %v683 = vunpack.c.h.b16 %v178
    %v684 = vunpack.c.l.b16 %v179
    %v685 = vunpack.c.h.b16 %v179
    %v686 = vunpack.c.l.b16 %v180
    %v687 = vunpack.c.h.b16 %v180
    %v688 = vunpack.c.l.b16 %v181
    %v689 = vunpack.c.h.b16 %v181
    %v690 = vunpack.c.l.b16 %v182
    %v691 = vunpack.c.h.b16 %v182
    %v692 = vunpack.c.l.b16 %v183
    %v693 = vunpack.c.h.b16 %v183
    %v694 = vunpack.c.l.b16 %v184
    %v695 = vunpack.c.h.b16 %v184
    %v696 = vunpack.c.l.b16 %v185
    %v697 = vunpack.c.h.b16 %v185
    %v698 = vunpack.c.l.b16 %v186
    %v699 = vunpack.c.h.b16 %v186
    %v700 = vunpack.c.l.b16 %v187
    %v701 = vunpack.c.h.b16 %v187
    %v702 = vunpack.c.l.b16 %v188
    %v703 = vunpack.c.h.b16 %v188
    %v704 = vunpack.c.l.b16 %v189
    %v705 = vunpack.c.h.b16 %v189
    %v706 = vunpack.c.l.b16 %v190
    %v707 = vunpack.c.h.b16 %v190
    %v708 = vunpack.c.l.b16 %v191
    %v709 = vunpack.c.h.b16 %v191
    %v710 = vunpack.c.l.b16 %v192
    %v711 = vunpack.c.h.b16 %v192
    %v712 = vunpack.c.l.b16 %v193
    %v713 = vunpack.c.h.b16 %v193
    %v714 = vunpack.c.l.b16 %v194
    %v715 = vunpack.c.h.b16 %v194
    %v716 = vunpack.c.l.b16 %v195
    %v717 = vunpack.c.h.b16 %v195
    %v718 = vunpack.c.l.b16 %v196
    %v719 = vunpack.c.h.b16 %v196
    %v720 = vunpack.c.l.b16 %v197
    %v721 = vunpack.c.h.b16 %v197
    %v722 = vunpack.c.l.b16 %v198
    %v723 = vunpack.c.h.b16 %v198
    %v724 = vunpack.c.l.b16 %v199
    %v725 = vunpack.c.h.b16 %v199
    %v726 = vunpack.c.l.b16 %v200
    %v727 = vunpack.c.h.b16 %v200
    %v728 = vunpack.c.l.b16 %v201
    %v729 = vunpack.c.h.b16 %v201
    %v730 = vunpack.c.l.b16 %v202
    %v731 = vunpack.c.h.b16 %v202
    %v732 = vunpack.c.l.b16 %v203
    %v733 = vunpack.c.h.b16 %v203
    %v734 = vunpack.c.l.b16 %v204
    %v735 = vunpack.c.h.b16 %v204
    %v736 = vunpack.c.l.b16 %v205
    %v737 = vunpack.c.h.b16 %v205
    %v738 = vunpack.c.l.b16 %v206
    %v739 = vunpack.c.h.b16 %v206
    %v740 = vunpack.c.l.b16 %v207
    %v741 = vunpack.c.h.b16 %v207
    %v742 = vunpack.c.l.b16 %v208
    %v743 = vunpack.c.h.b16 %v208
    %v744 = vunpack.c.l.b16 %v209
    %v745 = vunpack.c.h.b16 %v209
    %v746 = vunpack.c.l.b16 %v210
    %v747 = vunpack.c.h.b16 %v210
    %v748 = vunpack.c.l.b16 %v211
    %v749 = vunpack.c.h.b16 %v211
    %v750 = vunpack.c.l.b16 %v212
    %v751 = vunpack.c.h.b16 %v212
    %v752 = vunpack.c.l.b16 %v213
    %v753 = vunpack.c.h.b16 %v213
    %v754 = vunpack.c.l.b16 %v214
    %v755 = vunpack.c.h.b16 %v214
    %v756 = vunpack.c.l.b16 %v215
    %v757 = vunpack.c.h.b16 %v215
    %v758 = vunpack.c.l.b16 %v216
    %v759 = vunpack.c.h.b16 %v216
    %v760 = vunpack.c.l.b16 %v217
    %v761 = vunpack.c.h.b16 %v217
    %v762 = vunpack.c.l.b16 %v218
    %v763 = vunpack.c.h.b16 %v218
    %v764 = vunpack.c.l.b16 %v219
    %v765 = vunpack.c.h.b16 %v219
    %v766 = vunpack.c.l.b16 %v220
    %v767 = vunpack.c.h.b16 %v220
    %v768 = vunpack.c.l.b16 %v221
    %v769 = vunpack.c.h.b16 %v221
    %v770 = vunpack.c.l.b16 %v222
    %v771 = vunpack.c.h.b16 %v222
    %v772 = vunpack.c.l.b16 %v223
    %v773 = vunpack.c.h.b16 %v223
    %v774 = vunpack.c.l.b16 %v224
    %v775 = vunpack.c.h.b16 %v224
    %v776 = vunpack.c.l.b16 %v225
    %v777 = vunpack.c.h.b16 %v225
    %v778 = vunpack.c.l.b16 %v226
    %v779 = vunpack.c.h.b16 %v226
    %v780 = vunpack.c.l.b16 %v227
    %v781 = vunpack.c.h.b16 %v227
    %v782 = vunpack.c.l.b16 %v228
    %v783 = vunpack.c.h.b16 %v228
    %v784 = vunpack.c.l.b16 %v229
    %v785 = vunpack.c.h.b16 %v229
    %v786 = vunpack.c.l.b16 %v230
    %v787 = vunpack.c.h.b16 %v230
    %v788 = vunpack.c.l.b16 %v231
    %v789 = vunpack.c.h.b16 %v231
    %v790 = vunpack.c.l.b16 %v232
    %v791 = vunpack.c.h.b16 %v232
    %v792 = vunpack.c.l.b16 %v233
    %v793 = vunpack.c.h.b16 %v233
    %v794 = vunpack.c.l.b16 %v234
    %v795 = vunpack.c.h.b16 %v234
    %v796 = vunpack.c.l.b16 %v235
    %v797 = vunpack.c.h.b16 %v235
    %v798 = vunpack.c.l.b16 %v236
    %v799 = vunpack.c.h.b16 %v236
    %v800 = vunpack.c.l.b16 %v237
    %v801 = vunpack.c.h.b16 %v237
    %v802 = vunpack.c.l.b16 %v238
    %v803 = vunpack.c.h.b16 %v238
    %v804 = vunpack.c.l.b16 %v239
    %v805 = vunpack.c.h.b16 %v239
    %v806 = vunpack.c.l.b16 %v240
    %v807 = vunpack.c.h.b16 %v240
    %v808 = vunpack.c.l.b16 %v241
    %v809 = vunpack.c.h.b16 %v241
    %v810 = vunpack.c.l.b16 %v242
    %v811 = vunpack.c.h.b16 %v242
    %v812 = vunpack.c.l.b16 %v243
    %v813 = vunpack.c.h.b16 %v243
    %v814 = vunpack.c.l.b16 %v244
    %v815 = vunpack.c.h.b16 %v244
    %v816 = vunpack.c.l.b16 %v245
    %v817 = vunpack.c.h.b16 %v245
    %v818 = vunpack.c.l.b16 %v246
    %v819 = vunpack.c.h.b16 %v246
    %v820 = vunpack.c.l.b16 %v247
    %v821 = vunpack.c.h.b16 %v247
    %v822 = vunpack.c.l.b16 %v248
    %v823 = vunpack.c.h.b16 %v248
    %v824 = vunpack.c.l.b16 %v249
    %v825 = vunpack.c.h.b16 %v249
    %v826 = vunpack.c.l.b16 %v250
    %v827 = vunpack.c.h.b16 %v250
    %v828 = vunpack.c.l.b16 %v251
    %v829 = vunpack.c.h.b16 %v251
    %v830 = vunpack.c.l.b16 %v252
    %v831 = vunpack.c.h.b16 %v252
    %v832 = vunpack.c.l.b16 %v253
    %v833 = vunpack.c.h.b16 %v253
    %v834 = vunpack.c.l.b16 %v254
    %v835 = vunpack.c.h.b16 %v254
    %v836 = vunpack.c.l.b16 %v255
    %v837 = vunpack.c.h.b16 %v255
    %v838 = vunpack.c.l.b16 %v256
    %v839 = vunpack.c.h.b16 %v256
    %v840 = vunpack.c.l.b16 %v257
    %v841 = vunpack.c.h.b16 %v257
    %v842 = vunpack.c.l.b16 %v258
    %v843 = vunpack.c.h.b16 %v258
    %v844 = vunpack.c.l.b16 %v259
    %v845 = vunpack.c.h.b16 %v259
    %v846 = vunpack.c.l.b16 %v260
    %v847 = vunpack.c.h.b16 %v260
    %v848 = vunpack.c.l.b16 %v261
    %v849 = vunpack.c.h.b16 %v261
    %v850 = vunpack.c.l.b16 %v262
    %v851 = vunpack.c.h.b16 %v262
    %v852 = vunpack.c.l.b16 %v263
    %v853 = vunpack.c.h.b16 %v263
    %v854 = vunpack.c.l.b16 %v264
    %v855 = vunpack.c.h.b16 %v264
    %v856 = vunpack.c.l.b16 %v265
    %v857 = vunpack.c.h.b16 %v265
    %v858 = vunpack.c.l.b16 %v266
    %v859 = vunpack.c.h.b16 %v266
    %v860 = vunpack.c.l.b16 %v267
    %v861 = vunpack.c.h.b16 %v267
    %v862 = vunpack.c.l.b16 %v268
    %v863 = vunpack.c.h.b16 %v268
    %v864 = vunpack.c.l.b16 %v269
    %v865 = vunpack.c.h.b16 %v269
    %v866 = vunpack.c.l.b16 %v270
    %v867 = vunpack.c.h.b16 %v270
    %v868 = vunpack.c.l.b16 %v271
    %v869 = vunpack.c.h.b16 %v271
    %v870 = vpack.c.b16 %v482, %v478
    %v871 = vpack.c.b16 %v483, %v479
    %v872 = vpack.c.b16 %v484, %v480
    %v873 = vpack.c.b16 %v485, %v481
    %v874 = vpack.c.b16 %v490, %v486
    %v875 = vpack.c.b16 %v491, %v487
    %v876 = vpack.c.b16 %v492, %v488
    %v877 = vpack.c.b16 %v493, %v489
    %v878 = vpack.c.b16 %v498, %v494
    %v879 = vpack.c.b16 %v499, %v495
    %v880 = vpack.c.b16 %v500, %v496
    %v881 = vpack.c.b16 %v501, %v497
    %v882 = vpack.c.b16 %v506, %v502
    %v883 = vpack.c.b16 %v507, %v503
    %v884 = vpack.c.b16 %v508, %v504
    %v885 = vpack.c.b16 %v509, %v505
    %v886 = vpack.c.b16 %v514, %v510
    %v887 = vpack.c.b16 %v515, %v511
    %v888 = vpack.c.b16 %v516, %v512
    %v889 = vpack.c.b16 %v517, %v513
    %v890 = vpack.c.b16 %v522, %v518
    %v891 = vpack.c.b16 %v523, %v519
    %v892 = vpack.c.b16 %v524, %v520
    %v893 = vpack.c.b16 %v525, %v521
    %v894 = vpack.c.b16 %v530, %v526
    %v895 = vpack.c.b16 %v531, %v527
    %v896 = vpack.c.b16 %v532, %v528
    %v897 = vpack.c.b16 %v533, %v529
    %v898 = vpack.c.b16 %v538, %v534
    %v899 = vpack.c.b16 %v539, %v535
    %v900 = vpack.c.b16 %v540, %v536
    %v901 = vpack.c.b16 %v541, %v537
    %v902 = vpack.c.b16 %v546, %v542
    %v903 = vpack.c.b16 %v547, %v543
    %v904 = vpack.c.b16 %v548, %v544
    %v905 = vpack.c.b16 %v549, %v545
    %v906 = vpack.c.b16 %v554, %v550
    %v907 = vpack.c.b16 %v555, %v551
    %v908 = vpack.c.b16 %v556, %v552
    %v909 = vpack.c.b16 %v557, %v553
    %v910 = vpack.c.b16 %v562, %v558
    %v911 = vpack.c.b16 %v563, %v559
    %v912 = vpack.c.b16 %v564, %v560
    %v913 = vpack.c.b16 %v565, %v561
    %v914 = vpack.c.b16 %v570, %v566
    %v915 = vpack.c.b16 %v571, %v567
    %v916 = vpack.c.b16 %v572, %v568
    %v917 = vpack.c.b16 %v573, %v569
    %v918 = vpack.c.b16 %v578, %v574
    %v919 = vpack.c.b16 %v579, %v575
    %v920 = vpack.c.b16 %v580, %v576
    %v921 = vpack.c.b16 %v581, %v577
    %v922 = vpack.c.b16 %v586, %v582
    %v923 = vpack.c.b16 %v587, %v583
    %v924 = vpack.c.b16 %v588, %v584
    %v925 = vpack.c.b16 %v589, %v585
    %v926 = vpack.c.b16 %v594, %v590
    %v927 = vpack.c.b16 %v595, %v591
    %v928 = vpack.c.b16 %v596, %v592
    %v929 = vpack.c.b16 %v597, %v593
    %v930 = vpack.c.b16 %v602, %v598
    %v931 = vpack.c.b16 %v603, %v599
    %v932 = vpack.c.b16 %v604, %v600
    %v933 = vpack.c.b16 %v605, %v601
    %v934 = vpack.c.b16 %v610, %v606
    %v935 = vpack.c.b16 %v611, %v607
    %v936 = vpack.c.b16 %v612, %v608
    %v937 = vpack.c.b16 %v613, %v609
    %v938 = vpack.c.b16 %v618, %v614
    %v939 = vpack.c.b16 %v619, %v615
    %v940 = vpack.c.b16 %v620, %v616
    %v941 = vpack.c.b16 %v621, %v617
    %v942 = vpack.c.b16 %v626, %v622
    %v943 = vpack.c.b16 %v627, %v623
    %v944 = vpack.c.b16 %v628, %v624
    %v945 = vpack.c.b16 %v629, %v625
    %v946 = vpack.c.b16 %v634, %v630
    %v947 = vpack.c.b16 %v635, %v631
    %v948 = vpack.c.b16 %v636, %v632
    %v949 = vpack.c.b16 %v637, %v633
    %v950 = vpack.c.b16 %v642, %v638
    %v951 = vpack.c.b16 %v643, %v639
    %v952 = vpack.c.b16 %v644, %v640
    %v953 = vpack.c.b16 %v645, %v641
    %v954 = vpack.c.b16 %v650, %v646
    %v955 = vpack.c.b16 %v651, %v647
    %v956 = vpack.c.b16 %v652, %v648
    %v957 = vpack.c.b16 %v653, %v649
    %v958 = vpack.c.b16 %v658, %v654
    %v959 = vpack.c.b16 %v659, %v655
    %v960 = vpack.c.b16 %v660, %v656
    %v961 = vpack.c.b16 %v661, %v657
    %v962 = vpack.c.b16 %v666, %v662
    %v963 = vpack.c.b16 %v667, %v663
    %v964 = vpack.c.b16 %v668, %v664
    %v965 = vpack.c.b16 %v669, %v665
    %v966 = vpack.c.b16 %v674, %v670
    %v967 = vpack.c.b16 %v675, %v671
    %v968 = vpack.c.b16 %v676, %v672
    %v969 = vpack.c.b16 %v677, %v673
    %v970 = vpack.c.b16 %v682, %v678
    %v971 = vpack.c.b16 %v683, %v679
    %v972 = vpack.c.b16 %v684, %v680
    %v973 = vpack.c.b16 %v685, %v681
    %v974 = vpack.c.b16 %v690, %v686
    %v975 = vpack.c.b16 %v691, %v687
    %v976 = vpack.c.b16 %v692, %v688
    %v977 = vpack.c.b16 %v693, %v689
    %v978 = vpack.c.b16 %v698, %v694
    %v979 = vpack.c.b16 %v699, %v695
    %v980 = vpack.c.b16 %v700, %v696
    %v981 = vpack.c.b16 %v701, %v697
    %v982 = vpack.c.b16 %v706, %v702
    %v983 = vpack.c.b16 %v707, %v703
    %v984 = vpack.c.b16 %v708, %v704
    %v985 = vpack.c.b16 %v709, %v705
    %v986 = vpack.c.b16 %v714, %v710
    %v987 = vpack.c.b16 %v715, %v711
    %v988 = vpack.c.b16 %v716, %v712
    %v989 = vpack.c.b16 %v717, %v713
    %v990 = vpack.c.b16 %v722, %v718
    %v991 = vpack.c.b16 %v723, %v719
    %v992 = vpack.c.b16 %v724, %v720
    %v993 = vpack.c.b16 %v725, %v721
    %v994 = vpack.c.b16 %v730, %v726
    %v995 = vpack.c.b16 %v731, %v727
    %v996 = vpack.c.b16 %v732, %v728
    %v997 = vpack.c.b16 %v733, %v729
    %v998 = vpack.c.b16 %v738, %v734
    %v999 = vpack.c.b16 %v739, %v735
    %v1000 = vpack.c.b16 %v740, %v736
    %v1001 = vpack.c.b16 %v741, %v737
    %v1002 = vpack.c.b16 %v746, %v742
    %v1003 = vpack.c.b16 %v747, %v743
    %v1004 = vpack.c.b16 %v748, %v744
    %v1005 = vpack.c.b16 %v749, %v745
    %v1006 = vpack.c.b16 %v754, %v750
    %v1007 = vpack.c.b16 %v755, %v751
    %v1008 = vpack.c.b16 %v756, %v752
    %v1009 = vpack.c.b16 %v757, %v753
    %v1010 = vpack.c.b16 %v762, %v758
    %v1011 = vpack.c.b16 %v763, %v759
    %v1012 = vpack.c.b16 %v764, %v760
    %v1013 = vpack.c.b16 %v765, %v761
    %v1014 = vpack.c.b16 %v770, %v766
    %v1015 = vpack.c.b16 %v771, %v767
    %v1016 = vpack.c.b16 %v772, %v768
    %v1017 = vpack.c.b16 %v773, %v769
    %v1018 = vpack.c.b16 %v778, %v774
    %v1019 = vpack.c.b16 %v779, %v775
    %v1020 = vpack.c.b16 %v780, %v776
    %v1021 = vpack.c.b16 %v781, %v777
    %v1022 = vpack.c.b16 %v786, %v782
    %v1023 = vpack.c.b16 %v787, %v783
    %v1024 = vpack.c.b16 %v788, %v784
    %v1025 = vpack.c.b16 %v789, %v785
    %v1026 = vpack.c.b16 %v794, %v790
    %v1027 = vpack.c.b16 %v795, %v791
    %v1028 = vpack.c.b16 %v796, %v792
    %v1029 = vpack.c.b16 %v797, %v793
    %v1030 = vpack.c.b16 %v802, %v798
    %v1031 = vpack.c.b16 %v803, %v799
    %v1032 = vpack.c.b16 %v804, %v800
    %v1033 = vpack.c.b16 %v805, %v801
    %v1034 = vpack.c.b16 %v810, %v806
    %v1035 = vpack.c.b16 %v811, %v807
    %v1036 = vpack.c.b16 %v812, %v808
    %v1037 = vpack.c.b16 %v813, %v809
    %v1038 = vpack.c.b16 %v818, %v814
    %v1039 = vpack.c.b16 %v819, %v815
    %v1040 = vpack.c.b16 %v820, %v816
    %v1041 = vpack.c.b16 %v821, %v817
    %v1042 = vpack.c.b16 %v826, %v822
    %v1043 = vpack.c.b16 %v827, %v823
    %v1044 = vpack.c.b16 %v828, %v824
    %v1045 = vpack.c.b16 %v829, %v825
    %v1046 = vpack.c.b16 %v834, %v830
    %v1047 = vpack.c.b16 %v835, %v831
    %v1048 = vpack.c.b16 %v836, %v832
    %v1049 = vpack.c.b16 %v837, %v833
    %v1050 = vpack.c.b16 %v842, %v838
    %v1051 = vpack.c.b16 %v843, %v839
    %v1052 = vpack.c.b16 %v844, %v840
    %v1053 = vpack.c.b16 %v845, %v841
    %v1054 = vpack.c.b16 %v850, %v846
    %v1055 = vpack.c.b16 %v851, %v847
    %v1056 = vpack.c.b16 %v852, %v848
    %v1057 = vpack.c.b16 %v853, %v849
    %v1058 = vpack.c.b16 %v858, %v854
    %v1059 = vpack.c.b16 %v859, %v855
    %v1060 = vpack.c.b16 %v860, %v856
    %v1061 = vpack.c.b16 %v861, %v857
    %v1062 = vpack.c.b16 %v866, %v862
    %v1063 = vpack.c.b16 %v867, %v863
    %v1064 = vpack.c.b16 %v868, %v864
    %v1065 = vpack.c.b16 %v869, %v865
    %vm1262 = vcmask 130048
    %v1264 = vsel %vm1262, %v75, 0
    %1266 = vmatpush.bf16.msra.mxu0 %v898
    %1267 = vmatpush.bf16.msra.mxu0 %v894
    %1268 = vmatpush.bf16.msra.mxu0 %v890
    %1269 = vmatpush.bf16.msra.mxu0 %v886
    %1270 = vmatpush.bf16.msra.mxu0 %v882
    %1271 = vmatpush.bf16.msra.mxu0 %v878
    %1272 = vmatpush.bf16.msra.mxu0 %v874
    %1273 = vmatpush.bf16.msra.mxu0 %v870
    %1274 = vmatmul.bf16.gmra.mxu0 %v69
    %v1275 = vpop.f32.mrf.mxu0
    %v1276 = vadd.f32 %v274, %v1275
    %v1277 = vpop.f32.mrf.mxu0
    %v1278 = vadd.f32 %v274, %v1277
    %1279 = vdwg.mxu0
    %1280 = vmatpush.bf16.msra.mxu0 %v930
    %1281 = vmatpush.bf16.msra.mxu0 %v926
    %1282 = vmatpush.bf16.msra.mxu0 %v922
    %1283 = vmatpush.bf16.msra.mxu0 %v918
    %1284 = vmatpush.bf16.msra.mxu0 %v914
    %1285 = vmatpush.bf16.msra.mxu0 %v910
    %1286 = vmatpush.bf16.msra.mxu0 %v906
    %1287 = vmatpush.bf16.msra.mxu0 %v902
    %1288 = vmatmul.bf16.gmra.mxu0 %v70
    %v1289 = vpop.f32.mrf.mxu0
    %v1290 = vadd.f32 %v1276, %v1289
    %v1291 = vpop.f32.mrf.mxu0
    %v1292 = vadd.f32 %v1278, %v1291
    %1293 = vdwg.mxu0
    %1294 = vmatpush.bf16.msra.mxu0 %v962
    %1295 = vmatpush.bf16.msra.mxu0 %v958
    %1296 = vmatpush.bf16.msra.mxu0 %v954
    %1297 = vmatpush.bf16.msra.mxu0 %v950
    %1298 = vmatpush.bf16.msra.mxu0 %v946
    %1299 = vmatpush.bf16.msra.mxu0 %v942
    %1300 = vmatpush.bf16.msra.mxu0 %v938
    %1301 = vmatpush.bf16.msra.mxu0 %v934
    %1302 = vmatmul.bf16.gmra.mxu0 %v71
    %v1303 = vpop.f32.mrf.mxu0
    %v1304 = vadd.f32 %v1290, %v1303
    %v1305 = vpop.f32.mrf.mxu0
    %v1306 = vadd.f32 %v1292, %v1305
    %1307 = vdwg.mxu0
    %1308 = vmatpush.bf16.msra.mxu0 %v994
    %1309 = vmatpush.bf16.msra.mxu0 %v990
    %1310 = vmatpush.bf16.msra.mxu0 %v986
    %1311 = vmatpush.bf16.msra.mxu0 %v982
    %1312 = vmatpush.bf16.msra.mxu0 %v978
    %1313 = vmatpush.bf16.msra.mxu0 %v974
    %1314 = vmatpush.bf16.msra.mxu0 %v970
    %1315 = vmatpush.bf16.msra.mxu0 %v966
    %1316 = vmatmul.bf16.gmra.mxu0 %v72
    %v1317 = vpop.f32.mrf.mxu0
    %v1318 = vadd.f32 %v1304, %v1317
    %v1319 = vpop.f32.mrf.mxu0
    %v1320 = vadd.f32 %v1306, %v1319
    %1321 = vdwg.mxu0
    %1322 = vmatpush.bf16.msra.mxu0 %v1026
    %1323 = vmatpush.bf16.msra.mxu0 %v1022
    %1324 = vmatpush.bf16.msra.mxu0 %v1018
    %1325 = vmatpush.bf16.msra.mxu0 %v1014
    %1326 = vmatpush.bf16.msra.mxu0 %v1010
    %1327 = vmatpush.bf16.msra.mxu0 %v1006
    %1328 = vmatpush.bf16.msra.mxu0 %v1002
    %1329 = vmatpush.bf16.msra.mxu0 %v998
    %1330 = vmatmul.bf16.gmra.mxu0 %v73
    %v1331 = vpop.f32.mrf.mxu0
    %v1332 = vadd.f32 %v1318, %v1331
    %v1333 = vpop.f32.mrf.mxu0
    %v1334 = vadd.f32 %v1320, %v1333
    %1335 = vdwg.mxu0
    %1336 = vmatpush.bf16.msra.mxu0 %v1058
    %1337 = vmatpush.bf16.msra.mxu0 %v1054
    %1338 = vmatpush.bf16.msra.mxu0 %v1050
    %1339 = vmatpush.bf16.msra.mxu0 %v1046
    %1340 = vmatpush.bf16.msra.mxu0 %v1042
    %1341 = vmatpush.bf16.msra.mxu0 %v1038
    %1342 = vmatpush.bf16.msra.mxu0 %v1034
    %1343 = vmatpush.bf16.msra.mxu0 %v1030
    %1344 = vmatmul.bf16.gmra.mxu0 %v74
    %v1345 = vpop.f32.mrf.mxu0
    %v1346 = vadd.f32 %v1332, %v1345
    %v1347 = vpop.f32.mrf.mxu0
    %v1348 = vadd.f32 %v1334, %v1347
    %1349 = vdwg.mxu0
    %1350 = vmatpush.bf16.msra.mxu0 0
    %1351 = vmatpush.bf16.msra.mxu0 0
    %1352 = vmatpush.bf16.msra.mxu0 0
    %1353 = vmatpush.bf16.msra.mxu0 0
    %1354 = vmatpush.bf16.msra.mxu0 0
    %1355 = vmatpush.bf16.msra.mxu0 0
    %1356 = vmatpush.bf16.msra.mxu0 0
    %1357 = vmatpush.bf16.msra.mxu0 %v1062
    %1358 = vmatmul.bf16.gmra.mxu0 %v1264
    %v1359 = vpop.f32.mrf.mxu0
    %v1360 = vadd.f32 %v1346, %v1359
    %v1361 = vpop.f32.mrf.mxu0
    %v1362 = vadd.f32 %v1348, %v1361
    %1363 = vdwg.mxu0
    %1364 = vmatpush.bf16.msra.mxu0 %v899
    %1365 = vmatpush.bf16.msra.mxu0 %v895
    %1366 = vmatpush.bf16.msra.mxu0 %v891
    %1367 = vmatpush.bf16.msra.mxu0 %v887
    %1368 = vmatpush.bf16.msra.mxu0 %v883
    %1369 = vmatpush.bf16.msra.mxu0 %v879
    %1370 = vmatpush.bf16.msra.mxu0 %v875
    %1371 = vmatpush.bf16.msra.mxu0 %v871
    %1372 = vmatmul.bf16.gmra.mxu0 %v69
    %v1373 = vpop.f32.mrf.mxu0
    %v1374 = vadd.f32 %v275, %v1373
    %v1375 = vpop.f32.mrf.mxu0
    %v1376 = vadd.f32 %v275, %v1375
    %1377 = vdwg.mxu0
    %1378 = vmatpush.bf16.msra.mxu0 %v931
    %1379 = vmatpush.bf16.msra.mxu0 %v927
    %1380 = vmatpush.bf16.msra.mxu0 %v923
    %1381 = vmatpush.bf16.msra.mxu0 %v919
    %1382 = vmatpush.bf16.msra.mxu0 %v915
    %1383 = vmatpush.bf16.msra.mxu0 %v911
    %1384 = vmatpush.bf16.msra.mxu0 %v907
    %1385 = vmatpush.bf16.msra.mxu0 %v903
    %1386 = vmatmul.bf16.gmra.mxu0 %v70
    %v1387 = vpop.f32.mrf.mxu0
    %v1388 = vadd.f32 %v1374, %v1387
    %v1389 = vpop.f32.mrf.mxu0
    %v1390 = vadd.f32 %v1376, %v1389
    %1391 = vdwg.mxu0
    %1392 = vmatpush.bf16.msra.mxu0 %v963
    %1393 = vmatpush.bf16.msra.mxu0 %v959
    %1394 = vmatpush.bf16.msra.mxu0 %v955
    %1395 = vmatpush.bf16.msra.mxu0 %v951
    %1396 = vmatpush.bf16.msra.mxu0 %v947
    %1397 = vmatpush.bf16.msra.mxu0 %v943
    %1398 = vmatpush.bf16.msra.mxu0 %v939
    %1399 = vmatpush.bf16.msra.mxu0 %v935
    %1400 = vmatmul.bf16.gmra.mxu0 %v71
    %v1401 = vpop.f32.mrf.mxu0
    %v1402 = vadd.f32 %v1388, %v1401
    %v1403 = vpop.f32.mrf.mxu0
    %v1404 = vadd.f32 %v1390, %v1403
    %1405 = vdwg.mxu0
    %1406 = vmatpush.bf16.msra.mxu0 %v995
    %1407 = vmatpush.bf16.msra.mxu0 %v991
    %1408 = vmatpush.bf16.msra.mxu0 %v987
    %1409 = vmatpush.bf16.msra.mxu0 %v983
    %1410 = vmatpush.bf16.msra.mxu0 %v979
    %1411 = vmatpush.bf16.msra.mxu0 %v975
    %1412 = vmatpush.bf16.msra.mxu0 %v971
    %1413 = vmatpush.bf16.msra.mxu0 %v967
    %1414 = vmatmul.bf16.gmra.mxu0 %v72
    %v1415 = vpop.f32.mrf.mxu0
    %v1416 = vadd.f32 %v1402, %v1415
    %v1417 = vpop.f32.mrf.mxu0
    %v1418 = vadd.f32 %v1404, %v1417
    %1419 = vdwg.mxu0
    %1420 = vmatpush.bf16.msra.mxu0 %v1027
    %1421 = vmatpush.bf16.msra.mxu0 %v1023
    %1422 = vmatpush.bf16.msra.mxu0 %v1019
    %1423 = vmatpush.bf16.msra.mxu0 %v1015
    %1424 = vmatpush.bf16.msra.mxu0 %v1011
    %1425 = vmatpush.bf16.msra.mxu0 %v1007
    %1426 = vmatpush.bf16.msra.mxu0 %v1003
    %1427 = vmatpush.bf16.msra.mxu0 %v999
    %1428 = vmatmul.bf16.gmra.mxu0 %v73
    %v1429 = vpop.f32.mrf.mxu0
    %v1430 = vadd.f32 %v1416, %v1429
    %v1431 = vpop.f32.mrf.mxu0
    %v1432 = vadd.f32 %v1418, %v1431
    %1433 = vdwg.mxu0
    %1434 = vmatpush.bf16.msra.mxu0 %v1059
    %1435 = vmatpush.bf16.msra.mxu0 %v1055
    %1436 = vmatpush.bf16.msra.mxu0 %v1051
    %1437 = vmatpush.bf16.msra.mxu0 %v1047
    %1438 = vmatpush.bf16.msra.mxu0 %v1043
    %1439 = vmatpush.bf16.msra.mxu0 %v1039
    %1440 = vmatpush.bf16.msra.mxu0 %v1035
    %1441 = vmatpush.bf16.msra.mxu0 %v1031
    %1442 = vmatmul.bf16.gmra.mxu0 %v74
    %v1443 = vpop.f32.mrf.mxu0
    %v1444 = vadd.f32 %v1430, %v1443
    %v1445 = vpop.f32.mrf.mxu0
    %v1446 = vadd.f32 %v1432, %v1445
    %1447 = vdwg.mxu0
    %1448 = vmatpush.bf16.msra.mxu0 0
    %1449 = vmatpush.bf16.msra.mxu0 0
    %1450 = vmatpush.bf16.msra.mxu0 0
    %1451 = vmatpush.bf16.msra.mxu0 0
    %1452 = vmatpush.bf16.msra.mxu0 0
    %1453 = vmatpush.bf16.msra.mxu0 0
    %1454 = vmatpush.bf16.msra.mxu0 0
    %1455 = vmatpush.bf16.msra.mxu0 %v1063
    %1456 = vmatmul.bf16.gmra.mxu0 %v1264
    %v1457 = vpop.f32.mrf.mxu0
    %v1458 = vadd.f32 %v1444, %v1457
    %v1459 = vpop.f32.mrf.mxu0
    %v1460 = vadd.f32 %v1446, %v1459
    %1461 = vdwg.mxu0
    %1462 = vmatpush.bf16.msra.mxu0 %v900
    %1463 = vmatpush.bf16.msra.mxu0 %v896
    %1464 = vmatpush.bf16.msra.mxu0 %v892
    %1465 = vmatpush.bf16.msra.mxu0 %v888
    %1466 = vmatpush.bf16.msra.mxu0 %v884
    %1467 = vmatpush.bf16.msra.mxu0 %v880
    %1468 = vmatpush.bf16.msra.mxu0 %v876
    %1469 = vmatpush.bf16.msra.mxu0 %v872
    %1470 = vmatmul.bf16.gmra.mxu0 %v69
    %v1471 = vpop.f32.mrf.mxu0
    %v1472 = vadd.f32 %v276, %v1471
    %v1473 = vpop.f32.mrf.mxu0
    %v1474 = vadd.f32 %v276, %v1473
    %1475 = vdwg.mxu0
    %1476 = vmatpush.bf16.msra.mxu0 %v932
    %1477 = vmatpush.bf16.msra.mxu0 %v928
    %1478 = vmatpush.bf16.msra.mxu0 %v924
    %1479 = vmatpush.bf16.msra.mxu0 %v920
    %1480 = vmatpush.bf16.msra.mxu0 %v916
    %1481 = vmatpush.bf16.msra.mxu0 %v912
    %1482 = vmatpush.bf16.msra.mxu0 %v908
    %1483 = vmatpush.bf16.msra.mxu0 %v904
    %1484 = vmatmul.bf16.gmra.mxu0 %v70
    %v1485 = vpop.f32.mrf.mxu0
    %v1486 = vadd.f32 %v1472, %v1485
    %v1487 = vpop.f32.mrf.mxu0
    %v1488 = vadd.f32 %v1474, %v1487
    %1489 = vdwg.mxu0
    %1490 = vmatpush.bf16.msra.mxu0 %v964
    %1491 = vmatpush.bf16.msra.mxu0 %v960
    %1492 = vmatpush.bf16.msra.mxu0 %v956
    %1493 = vmatpush.bf16.msra.mxu0 %v952
    %1494 = vmatpush.bf16.msra.mxu0 %v948
    %1495 = vmatpush.bf16.msra.mxu0 %v944
    %1496 = vmatpush.bf16.msra.mxu0 %v940
    %1497 = vmatpush.bf16.msra.mxu0 %v936
    %1498 = vmatmul.bf16.gmra.mxu0 %v71
    %v1499 = vpop.f32.mrf.mxu0
    %v1500 = vadd.f32 %v1486, %v1499
    %v1501 = vpop.f32.mrf.mxu0
    %v1502 = vadd.f32 %v1488, %v1501
    %1503 = vdwg.mxu0
    %1504 = vmatpush.bf16.msra.mxu0 %v996
    %1505 = vmatpush.bf16.msra.mxu0 %v992
    %1506 = vmatpush.bf16.msra.mxu0 %v988
    %1507 = vmatpush.bf16.msra.mxu0 %v984
    %1508 = vmatpush.bf16.msra.mxu0 %v980
    %1509 = vmatpush.bf16.msra.mxu0 %v976
    %1510 = vmatpush.bf16.msra.mxu0 %v972
    %1511 = vmatpush.bf16.msra.mxu0 %v968
    %1512 = vmatmul.bf16.gmra.mxu0 %v72
    %v1513 = vpop.f32.mrf.mxu0
    %v1514 = vadd.f32 %v1500, %v1513
    %v1515 = vpop.f32.mrf.mxu0
    %v1516 = vadd.f32 %v1502, %v1515
    %1517 = vdwg.mxu0
    %1518 = vmatpush.bf16.msra.mxu0 %v1028
    %1519 = vmatpush.bf16.msra.mxu0 %v1024
    %1520 = vmatpush.bf16.msra.mxu0 %v1020
    %1521 = vmatpush.bf16.msra.mxu0 %v1016
    %1522 = vmatpush.bf16.msra.mxu0 %v1012
    %1523 = vmatpush.bf16.msra.mxu0 %v1008
    %1524 = vmatpush.bf16.msra.mxu0 %v1004
    %1525 = vmatpush.bf16.msra.mxu0 %v1000
    %1526 = vmatmul.bf16.gmra.mxu0 %v73
    %v1527 = vpop.f32.mrf.mxu0
    %v1528 = vadd.f32 %v1514, %v1527
    %v1529 = vpop.f32.mrf.mxu0
    %v1530 = vadd.f32 %v1516, %v1529
    %1531 = vdwg.mxu0
    %1532 = vmatpush.bf16.msra.mxu0 %v1060
    %1533 = vmatpush.bf16.msra.mxu0 %v1056
    %1534 = vmatpush.bf16.msra.mxu0 %v1052
    %1535 = vmatpush.bf16.msra.mxu0 %v1048
    %1536 = vmatpush.bf16.msra.mxu0 %v1044
    %1537 = vmatpush.bf16.msra.mxu0 %v1040
    %1538 = vmatpush.bf16.msra.mxu0 %v1036
    %1539 = vmatpush.bf16.msra.mxu0 %v1032
    %1540 = vmatmul.bf16.gmra.mxu0 %v74
    %v1541 = vpop.f32.mrf.mxu0
    %v1542 = vadd.f32 %v1528, %v1541
    %v1543 = vpop.f32.mrf.mxu0
    %v1544 = vadd.f32 %v1530, %v1543
    %1545 = vdwg.mxu0
    %1546 = vmatpush.bf16.msra.mxu0 0
    %1547 = vmatpush.bf16.msra.mxu0 0
    %1548 = vmatpush.bf16.msra.mxu0 0
    %1549 = vmatpush.bf16.msra.mxu0 0
    %1550 = vmatpush.bf16.msra.mxu0 0
    %1551 = vmatpush.bf16.msra.mxu0 0
    %1552 = vmatpush.bf16.msra.mxu0 0
    %1553 = vmatpush.bf16.msra.mxu0 %v1064
    %1554 = vmatmul.bf16.gmra.mxu0 %v1264
    %v1555 = vpop.f32.mrf.mxu0
    %v1556 = vadd.f32 %v1542, %v1555
    %v1557 = vpop.f32.mrf.mxu0
    %v1558 = vadd.f32 %v1544, %v1557
    %1559 = vdwg.mxu0
    %1560 = vmatpush.bf16.msra.mxu0 %v901
    %1561 = vmatpush.bf16.msra.mxu0 %v897
    %1562 = vmatpush.bf16.msra.mxu0 %v893
    %1563 = vmatpush.bf16.msra.mxu0 %v889
    %1564 = vmatpush.bf16.msra.mxu0 %v885
    %1565 = vmatpush.bf16.msra.mxu0 %v881
    %1566 = vmatpush.bf16.msra.mxu0 %v877
    %1567 = vmatpush.bf16.msra.mxu0 %v873
    %1568 = vmatmul.bf16.gmra.mxu0 %v69
    %v1569 = vpop.f32.mrf.mxu0
    %v1570 = vadd.f32 %v277, %v1569
    %v1571 = vpop.f32.mrf.mxu0
    %v1572 = vadd.f32 %v277, %v1571
    %1573 = vdwg.mxu0
    %1574 = vmatpush.bf16.msra.mxu0 %v933
    %1575 = vmatpush.bf16.msra.mxu0 %v929
    %1576 = vmatpush.bf16.msra.mxu0 %v925
    %1577 = vmatpush.bf16.msra.mxu0 %v921
    %1578 = vmatpush.bf16.msra.mxu0 %v917
    %1579 = vmatpush.bf16.msra.mxu0 %v913
    %1580 = vmatpush.bf16.msra.mxu0 %v909
    %1581 = vmatpush.bf16.msra.mxu0 %v905
    %1582 = vmatmul.bf16.gmra.mxu0 %v70
    %v1583 = vpop.f32.mrf.mxu0
    %v1584 = vadd.f32 %v1570, %v1583
    %v1585 = vpop.f32.mrf.mxu0
    %v1586 = vadd.f32 %v1572, %v1585
    %1587 = vdwg.mxu0
    %1588 = vmatpush.bf16.msra.mxu0 %v965
    %1589 = vmatpush.bf16.msra.mxu0 %v961
    %1590 = vmatpush.bf16.msra.mxu0 %v957
    %1591 = vmatpush.bf16.msra.mxu0 %v953
    %1592 = vmatpush.bf16.msra.mxu0 %v949
    %1593 = vmatpush.bf16.msra.mxu0 %v945
    %1594 = vmatpush.bf16.msra.mxu0 %v941
    %1595 = vmatpush.bf16.msra.mxu0 %v937
    %1596 = vmatmul.bf16.gmra.mxu0 %v71
    %v1597 = vpop.f32.mrf.mxu0
    %v1598 = vadd.f32 %v1584, %v1597
    %v1599 = vpop.f32.mrf.mxu0
    %v1600 = vadd.f32 %v1586, %v1599
    %1601 = vdwg.mxu0
    %1602 = vmatpush.bf16.msra.mxu0 %v997
    %1603 = vmatpush.bf16.msra.mxu0 %v993
    %1604 = vmatpush.bf16.msra.mxu0 %v989
    %1605 = vmatpush.bf16.msra.mxu0 %v985
    %1606 = vmatpush.bf16.msra.mxu0 %v981
    %1607 = vmatpush.bf16.msra.mxu0 %v977
    %1608 = vmatpush.bf16.msra.mxu0 %v973
    %1609 = vmatpush.bf16.msra.mxu0 %v969
    %1610 = vmatmul.bf16.gmra.mxu0 %v72
    %v1611 = vpop.f32.mrf.mxu0
    %v1612 = vadd.f32 %v1598, %v1611
    %v1613 = vpop.f32.mrf.mxu0
    %v1614 = vadd.f32 %v1600, %v1613
    %1615 = vdwg.mxu0
    %1616 = vmatpush.bf16.msra.mxu0 %v1029
    %1617 = vmatpush.bf16.msra.mxu0 %v1025
    %1618 = vmatpush.bf16.msra.mxu0 %v1021
    %1619 = vmatpush.bf16.msra.mxu0 %v1017
    %1620 = vmatpush.bf16.msra.mxu0 %v1013
    %1621 = vmatpush.bf16.msra.mxu0 %v1009
    %1622 = vmatpush.bf16.msra.mxu0 %v1005
    %1623 = vmatpush.bf16.msra.mxu0 %v1001
    %1624 = vmatmul.bf16.gmra.mxu0 %v73
    %v1625 = vpop.f32.mrf.mxu0
    %v1626 = vadd.f32 %v1612, %v1625
    %v1627 = vpop.f32.mrf.mxu0
    %v1628 = vadd.f32 %v1614, %v1627
    %1629 = vdwg.mxu0
    %1630 = vmatpush.bf16.msra.mxu0 %v1061
    %1631 = vmatpush.bf16.msra.mxu0 %v1057
    %1632 = vmatpush.bf16.msra.mxu0 %v1053
    %1633 = vmatpush.bf16.msra.mxu0 %v1049
    %1634 = vmatpush.bf16.msra.mxu0 %v1045
    %1635 = vmatpush.bf16.msra.mxu0 %v1041
    %1636 = vmatpush.bf16.msra.mxu0 %v1037
    %1637 = vmatpush.bf16.msra.mxu0 %v1033
    %1638 = vmatmul.bf16.gmra.mxu0 %v74
    %v1639 = vpop.f32.mrf.mxu0
    %v1640 = vadd.f32 %v1626, %v1639
    %v1641 = vpop.f32.mrf.mxu0
    %v1642 = vadd.f32 %v1628, %v1641
    %1643 = vdwg.mxu0
    %1644 = vmatpush.bf16.msra.mxu0 0
    %1645 = vmatpush.bf16.msra.mxu0 0
    %1646 = vmatpush.bf16.msra.mxu0 0
    %1647 = vmatpush.bf16.msra.mxu0 0
    %1648 = vmatpush.bf16.msra.mxu0 0
    %1649 = vmatpush.bf16.msra.mxu0 0
    %1650 = vmatpush.bf16.msra.mxu0 0
    %1651 = vmatpush.bf16.msra.mxu0 %v1065
    %1652 = vmatmul.bf16.gmra.mxu0 %v1264
    %v1653 = vpop.f32.mrf.mxu0
    %v1654 = vadd.f32 %v1640, %v1653
    %v1655 = vpop.f32.mrf.mxu0
    %v1656 = vadd.f32 %v1642, %v1655
    %1657 = vdwg.mxu0
    %v1658 = vld [vmem:[%s3] sm:$0xf]
    %v1659 = vld [vmem:[%s4] sm:$0xf]
    %v1660 = vadd.f32 %v1360, %v1458
    %v1661 = vadd.f32 %v1660, %v1556
    %v1662 = vadd.f32 %v1661, %v1654
    %1663 = vadd.xlane.f32.xlu0 %v1662
    %v1664 = vpop.xlane.xlu0 %1663
    %v1665 = vadd.f32 %v1362, %v1460
    %v1666 = vadd.f32 %v1665, %v1558
    %v1667 = vadd.f32 %v1666, %v1656
    %1668 = vadd.xlane.f32.xlu0 %v1667
    %v1669 = vpop.xlane.xlu0 %1668
    %v1670 = vrcp.pop 512.0
    %v1671 = vmul.f32 512.0, %v1670
    %v1672 = vsub.f32 1.0, %v1671
    %v1673 = vmul.f32 %v1670, %v1672
    %v1674 = vadd.f32 %v1670, %v1673
    %vm1675 = vweird.f32 %v1670
    %v1676 = vsel %vm1675, %v1670, %v1674
    %v1677 = vmul.f32 %v1664, %v1676
    %v1678 = vmul.f32 %v1669, %v1676
    %v1679 = vmul.f32 %v1360, %v1360
    %v1680 = vmul.f32 %v1458, %v1458
    %v1681 = vmul.f32 %v1556, %v1556
    %v1682 = vmul.f32 %v1654, %v1654
    %v1683 = vmul.f32 %v1362, %v1362
    %v1684 = vmul.f32 %v1460, %v1460
    %v1685 = vmul.f32 %v1558, %v1558
    %v1686 = vmul.f32 %v1656, %v1656
    %v1687 = vadd.f32 %v1679, %v1680
    %v1688 = vadd.f32 %v1687, %v1681
    %v1689 = vadd.f32 %v1688, %v1682
    %1690 = vadd.xlane.f32.xlu0 %v1689
    %v1691 = vpop.xlane.xlu0 %1690
    %v1692 = vadd.f32 %v1683, %v1684
    %v1693 = vadd.f32 %v1692, %v1685
    %v1694 = vadd.f32 %v1693, %v1686
    %1695 = vadd.xlane.f32.xlu0 %v1694
    %v1696 = vpop.xlane.xlu0 %1695
    %v1697 = vmul.f32 %v1691, %v1676
    %v1698 = vmul.f32 %v1696, %v1676
    %v1699 = vmul.f32 %v1677, %v1677
    %v1700 = vmul.f32 %v1678, %v1678
    %v1701 = vsub.f32 %v1697, %v1699
    %v1702 = vsub.f32 %v1698, %v1700
    %v1703 = vsub.f32 %v1360, %v1677
    %v1704 = vsub.f32 %v1458, %v1677
    %v1705 = vsub.f32 %v1556, %v1677
    %v1706 = vsub.f32 %v1654, %v1677
    %v1707 = vsub.f32 %v1362, %v1678
    %v1708 = vsub.f32 %v1460, %v1678
    %v1709 = vsub.f32 %v1558, %v1678
    %v1710 = vsub.f32 %v1656, %v1678
    %v1711 = vadd.f32 %v1701, 1e-05
    %v1712 = vadd.f32 %v1702, 1e-05
    %v1713 = vrsqrt.pop %v1711
    %v1714 = vmul.f32 %v1713, %v1711
    %v1715 = vmul.f32 %v1714, %v1713
    %v1716 = vmul.f32 0.5, %v1715
    %v1717 = vsub.f32 1.5, %v1716
    %v1718 = vmul.f32 %v1713, %v1717
    %vm1719 = vweird.f32 %v1711
    %vm1720 = vweird.f32 %v1713
    %vm1721 = vmor %vm1719, %vm1720
    %v1722 = vsel %vm1721, %v1713, %v1718
    %v1723 = vrsqrt.pop %v1712
    %v1724 = vmul.f32 %v1723, %v1712
    %v1725 = vmul.f32 %v1724, %v1723
    %v1726 = vmul.f32 0.5, %v1725
    %v1727 = vsub.f32 1.5, %v1726
    %v1728 = vmul.f32 %v1723, %v1727
    %vm1729 = vweird.f32 %v1712
    %vm1730 = vweird.f32 %v1723
    %vm1731 = vmor %vm1729, %vm1730
    %v1732 = vsel %vm1731, %v1723, %v1728
    %v1733 = vmul.f32 %v1703, %v1722
    %v1734 = vmul.f32 %v1704, %v1722
    %v1735 = vmul.f32 %v1705, %v1722
    %v1736 = vmul.f32 %v1706, %v1722
    %v1737 = vmul.f32 %v1707, %v1732
    %v1738 = vmul.f32 %v1708, %v1732
    %v1739 = vmul.f32 %v1709, %v1732
    %v1740 = vmul.f32 %v1710, %v1732
    %v1742 = vperm.slane %v1658, 0
    %v1743 = vperm.slane %v1658, 1
    %v1744 = vperm.slane %v1658, 2
    %v1745 = vperm.slane %v1658, 3
    %v1750 = vmul.f32 %v1733, %v1742
    %v1751 = vmul.f32 %v1734, %v1743
    %v1752 = vmul.f32 %v1735, %v1744
    %v1753 = vmul.f32 %v1736, %v1745
    %v1754 = vmul.f32 %v1737, %v1742
    %v1755 = vmul.f32 %v1738, %v1743
    %v1756 = vmul.f32 %v1739, %v1744
    %v1757 = vmul.f32 %v1740, %v1745
    %v1759 = vperm.slane %v1659, 0
    %v1760 = vperm.slane %v1659, 1
    %v1761 = vperm.slane %v1659, 2
    %v1762 = vperm.slane %v1659, 3
    %v1767 = vadd.f32 %v1750, %v1759
    %v1768 = vadd.f32 %v1751, %v1760
    %v1769 = vadd.f32 %v1752, %v1761
    %v1770 = vadd.f32 %v1753, %v1762
    %v1771 = vadd.f32 %v1754, %v1759
    %v1772 = vadd.f32 %v1755, %v1760
    %v1773 = vadd.f32 %v1756, %v1761
    %v1774 = vadd.f32 %v1757, %v1762
    %v1775 = vmax.f32 %v1767, 0.0
    %v1776 = vmax.f32 %v1768, 0.0
    %v1777 = vmax.f32 %v1769, 0.0
    %v1778 = vmax.f32 %v1770, 0.0
    %v1779 = vmax.f32 %v1771, 0.0
    %v1780 = vmax.f32 %v1772, 0.0
    %v1781 = vmax.f32 %v1773, 0.0
    %v1782 = vmax.f32 %v1774, 0.0
    %v1783 = vpack.c.bf16 %v1779, %v1775
    %v1784 = vpack.c.bf16 %v1780, %v1776
    %v1785 = vpack.c.bf16 %v1781, %v1777
    %v1786 = vpack.c.bf16 %v1782, %v1778
    %v1787 = vld [vmem:[%s5] sm:$0xf]
    %v1788 = vld [vmem:[%s5 + $0x4] sm:$0xf]
    %v1789 = vld [vmem:[%s5 + $0x8] sm:$0xf]
    %v1790 = vld [vmem:[%s5 + $0xc] sm:$0xf]
    %v1791 = vld [vmem:[%s5 + $0x10] sm:$0xf]
    %v1792 = vld [vmem:[%s5 + $0x14] sm:$0xf]
    %v1793 = vld [vmem:[%s5 + $0x18] sm:$0xf]
    %v1794 = vld [vmem:[%s5 + $0x1c] sm:$0xf]
    %v1795 = vld [vmem:[%s5 + $0x20] sm:$0xf]
    %v1796 = vld [vmem:[%s5 + $0x24] sm:$0xf]
    %v1797 = vld [vmem:[%s5 + $0x28] sm:$0xf]
    %v1798 = vld [vmem:[%s5 + $0x2c] sm:$0xf]
    %v1799 = vld [vmem:[%s5 + $0x30] sm:$0xf]
    %v1800 = vld [vmem:[%s5 + $0x34] sm:$0xf]
    %v1801 = vld [vmem:[%s5 + $0x38] sm:$0xf]
    %v1802 = vld [vmem:[%s5 + $0x3c] sm:$0xf]
    %v1803 = vld [vmem:[%s5 + $0x40] sm:$0xf]
    %v1804 = vld [vmem:[%s5 + $0x44] sm:$0xf]
    %v1805 = vld [vmem:[%s5 + $0x48] sm:$0xf]
    %v1806 = vld [vmem:[%s5 + $0x4c] sm:$0xf]
    %v1807 = vld [vmem:[%s5 + $0x50] sm:$0xf]
    %v1808 = vld [vmem:[%s5 + $0x54] sm:$0xf]
    %v1809 = vld [vmem:[%s5 + $0x58] sm:$0xf]
    %v1810 = vld [vmem:[%s5 + $0x5c] sm:$0xf]
    %v1811 = vld [vmem:[%s5 + $0x60] sm:$0xf]
    %v1812 = vld [vmem:[%s5 + $0x64] sm:$0xf]
    %v1813 = vld [vmem:[%s5 + $0x68] sm:$0xf]
    %v1814 = vld [vmem:[%s5 + $0x6c] sm:$0xf]
    %v1815 = vld [vmem:[%s5 + $0x70] sm:$0xf]
    %v1816 = vld [vmem:[%s5 + $0x74] sm:$0xf]
    %v1817 = vld [vmem:[%s5 + $0x78] sm:$0xf]
    %v1818 = vld [vmem:[%s5 + $0x7c] sm:$0xf]
    %v1819 = vld [vmem:[%s5 + $0x80] sm:$0xf]
    %v1820 = vld [vmem:[%s5 + $0x84] sm:$0xf]
    %v1821 = vld [vmem:[%s5 + $0x88] sm:$0xf]
    %v1822 = vld [vmem:[%s5 + $0x8c] sm:$0xf]
    %v1823 = vld [vmem:[%s5 + $0x90] sm:$0xf]
    %v1824 = vld [vmem:[%s5 + $0x94] sm:$0xf]
    %v1825 = vld [vmem:[%s5 + $0x98] sm:$0xf]
    %v1826 = vld [vmem:[%s5 + $0x9c] sm:$0xf]
    %v1827 = vld [vmem:[%s5 + $0xa0] sm:$0xf]
    %v1828 = vld [vmem:[%s5 + $0xa4] sm:$0xf]
    %v1829 = vld [vmem:[%s5 + $0xa8] sm:$0xf]
    %v1830 = vld [vmem:[%s5 + $0xac] sm:$0xf]
    %v1831 = vld [vmem:[%s5 + $0xb0] sm:$0xf]
    %v1832 = vld [vmem:[%s5 + $0xb4] sm:$0xf]
    %v1833 = vld [vmem:[%s5 + $0xb8] sm:$0xf]
    %v1834 = vld [vmem:[%s5 + $0xbc] sm:$0xf]
    %v1835 = vld [vmem:[%s5 + $0xc0] sm:$0xf]
    %v1836 = vld [vmem:[%s5 + $0xc4] sm:$0xf]
    %v1837 = vld [vmem:[%s5 + $0xc8] sm:$0xf]
    %v1838 = vld [vmem:[%s5 + $0xcc] sm:$0xf]
    %v1839 = vld [vmem:[%s5 + $0xd0] sm:$0xf]
    %v1840 = vld [vmem:[%s5 + $0xd4] sm:$0xf]
    %v1841 = vld [vmem:[%s5 + $0xd8] sm:$0xf]
    %v1842 = vld [vmem:[%s5 + $0xdc] sm:$0xf]
    %v1843 = vld [vmem:[%s5 + $0xe0] sm:$0xf]
    %v1844 = vld [vmem:[%s5 + $0xe4] sm:$0xf]
    %v1845 = vld [vmem:[%s5 + $0xe8] sm:$0xf]
    %v1846 = vld [vmem:[%s5 + $0xec] sm:$0xf]
    %v1847 = vld [vmem:[%s5 + $0xf0] sm:$0xf]
    %v1848 = vld [vmem:[%s5 + $0xf4] sm:$0xf]
    %v1849 = vld [vmem:[%s5 + $0xf8] sm:$0xf]
    %v1850 = vld [vmem:[%s5 + $0xfc] sm:$0xf]
    %v1851 = vld [vmem:[%s6] sm:$0x1]
    %v1853 = vperm.slane %v1851, 0
    %v1919 = vunpack.c.l.b16 %v1787
    %v1920 = vunpack.c.l.b16 %v1788
    %v1921 = vunpack.c.l.b16 %v1789
    %v1922 = vunpack.c.l.b16 %v1790
    %v1923 = vunpack.c.l.b16 %v1791
    %v1924 = vunpack.c.l.b16 %v1792
    %v1925 = vunpack.c.l.b16 %v1793
    %v1926 = vunpack.c.l.b16 %v1794
    %v1927 = vunpack.c.l.b16 %v1795
    %v1928 = vunpack.c.l.b16 %v1796
    %v1929 = vunpack.c.l.b16 %v1797
    %v1930 = vunpack.c.l.b16 %v1798
    %v1931 = vunpack.c.l.b16 %v1799
    %v1932 = vunpack.c.l.b16 %v1800
    %v1933 = vunpack.c.l.b16 %v1801
    %v1934 = vunpack.c.l.b16 %v1802
    %v1935 = vunpack.c.l.b16 %v1803
    %v1936 = vunpack.c.l.b16 %v1804
    %v1937 = vunpack.c.l.b16 %v1805
    %v1938 = vunpack.c.l.b16 %v1806
    %v1939 = vunpack.c.l.b16 %v1807
    %v1940 = vunpack.c.l.b16 %v1808
    %v1941 = vunpack.c.l.b16 %v1809
    %v1942 = vunpack.c.l.b16 %v1810
    %v1943 = vunpack.c.l.b16 %v1811
    %v1944 = vunpack.c.l.b16 %v1812
    %v1945 = vunpack.c.l.b16 %v1813
    %v1946 = vunpack.c.l.b16 %v1814
    %v1947 = vunpack.c.l.b16 %v1815
    %v1948 = vunpack.c.l.b16 %v1816
    %v1949 = vunpack.c.l.b16 %v1817
    %v1950 = vunpack.c.l.b16 %v1818
    %v1951 = vunpack.c.l.b16 %v1819
    %v1952 = vunpack.c.l.b16 %v1820
    %v1953 = vunpack.c.l.b16 %v1821
    %v1954 = vunpack.c.l.b16 %v1822
    %v1955 = vunpack.c.l.b16 %v1823
    %v1956 = vunpack.c.l.b16 %v1824
    %v1957 = vunpack.c.l.b16 %v1825
    %v1958 = vunpack.c.l.b16 %v1826
    %v1959 = vunpack.c.l.b16 %v1827
    %v1960 = vunpack.c.l.b16 %v1828
    %v1961 = vunpack.c.l.b16 %v1829
    %v1962 = vunpack.c.l.b16 %v1830
    %v1963 = vunpack.c.l.b16 %v1831
    %v1964 = vunpack.c.l.b16 %v1832
    %v1965 = vunpack.c.l.b16 %v1833
    %v1966 = vunpack.c.l.b16 %v1834
    %v1967 = vunpack.c.l.b16 %v1835
    %v1968 = vunpack.c.l.b16 %v1836
    %v1969 = vunpack.c.l.b16 %v1837
    %v1970 = vunpack.c.l.b16 %v1838
    %v1971 = vunpack.c.l.b16 %v1839
    %v1972 = vunpack.c.l.b16 %v1840
    %v1973 = vunpack.c.l.b16 %v1841
    %v1974 = vunpack.c.l.b16 %v1842
    %v1975 = vunpack.c.l.b16 %v1843
    %v1976 = vunpack.c.l.b16 %v1844
    %v1977 = vunpack.c.l.b16 %v1845
    %v1978 = vunpack.c.l.b16 %v1846
    %v1979 = vunpack.c.l.b16 %v1847
    %v1980 = vunpack.c.l.b16 %v1848
    %v1981 = vunpack.c.l.b16 %v1849
    %v1982 = vunpack.c.l.b16 %v1850
    %v1983 = vpack.c.b16 %v1920, %v1919
    %v1984 = vpack.c.b16 %v1922, %v1921
    %v1985 = vpack.c.b16 %v1924, %v1923
    %v1986 = vpack.c.b16 %v1926, %v1925
    %v1987 = vpack.c.b16 %v1928, %v1927
    %v1988 = vpack.c.b16 %v1930, %v1929
    %v1989 = vpack.c.b16 %v1932, %v1931
    %v1990 = vpack.c.b16 %v1934, %v1933
    %v1991 = vpack.c.b16 %v1936, %v1935
    %v1992 = vpack.c.b16 %v1938, %v1937
    %v1993 = vpack.c.b16 %v1940, %v1939
    %v1994 = vpack.c.b16 %v1942, %v1941
    %v1995 = vpack.c.b16 %v1944, %v1943
    %v1996 = vpack.c.b16 %v1946, %v1945
    %v1997 = vpack.c.b16 %v1948, %v1947
    %v1998 = vpack.c.b16 %v1950, %v1949
    %v1999 = vpack.c.b16 %v1952, %v1951
    %v2000 = vpack.c.b16 %v1954, %v1953
    %v2001 = vpack.c.b16 %v1956, %v1955
    %v2002 = vpack.c.b16 %v1958, %v1957
    %v2003 = vpack.c.b16 %v1960, %v1959
    %v2004 = vpack.c.b16 %v1962, %v1961
    %v2005 = vpack.c.b16 %v1964, %v1963
    %v2006 = vpack.c.b16 %v1966, %v1965
    %v2007 = vpack.c.b16 %v1968, %v1967
    %v2008 = vpack.c.b16 %v1970, %v1969
    %v2009 = vpack.c.b16 %v1972, %v1971
    %v2010 = vpack.c.b16 %v1974, %v1973
    %v2011 = vpack.c.b16 %v1976, %v1975
    %v2012 = vpack.c.b16 %v1978, %v1977
    %v2013 = vpack.c.b16 %v1980, %v1979
    %v2014 = vpack.c.b16 %v1982, %v1981
    %2047 = vmatpush.bf16.msra.mxu0 %v1990
    %2048 = vmatpush.bf16.msra.mxu0 %v1989
    %2049 = vmatpush.bf16.msra.mxu0 %v1988
    %2050 = vmatpush.bf16.msra.mxu0 %v1987
    %2051 = vmatpush.bf16.msra.mxu0 %v1986
    %2052 = vmatpush.bf16.msra.mxu0 %v1985
    %2053 = vmatpush.bf16.msra.mxu0 %v1984
    %2054 = vmatpush.bf16.msra.mxu0 %v1983
    %2055 = vmatmul.bf16.gmra.mxu0 %v1783
    %v2056 = vpop.f32.mrf.mxu0
    %v2057 = vadd.f32 %v1853, %v2056
    %v2058 = vpop.f32.mrf.mxu0
    %v2059 = vadd.f32 %v1853, %v2058
    %2060 = vdwg.mxu0
    %2061 = vmatpush.bf16.msra.mxu0 %v1998
    %2062 = vmatpush.bf16.msra.mxu0 %v1997
    %2063 = vmatpush.bf16.msra.mxu0 %v1996
    %2064 = vmatpush.bf16.msra.mxu0 %v1995
    %2065 = vmatpush.bf16.msra.mxu0 %v1994
    %2066 = vmatpush.bf16.msra.mxu0 %v1993
    %2067 = vmatpush.bf16.msra.mxu0 %v1992
    %2068 = vmatpush.bf16.msra.mxu0 %v1991
    %2069 = vmatmul.bf16.gmra.mxu0 %v1784
    %v2070 = vpop.f32.mrf.mxu0
    %v2071 = vadd.f32 %v2057, %v2070
    %v2072 = vpop.f32.mrf.mxu0
    %v2073 = vadd.f32 %v2059, %v2072
    %2074 = vdwg.mxu0
    %2075 = vmatpush.bf16.msra.mxu0 %v2006
    %2076 = vmatpush.bf16.msra.mxu0 %v2005
    %2077 = vmatpush.bf16.msra.mxu0 %v2004
    %2078 = vmatpush.bf16.msra.mxu0 %v2003
    %2079 = vmatpush.bf16.msra.mxu0 %v2002
    %2080 = vmatpush.bf16.msra.mxu0 %v2001
    %2081 = vmatpush.bf16.msra.mxu0 %v2000
    %2082 = vmatpush.bf16.msra.mxu0 %v1999
    %2083 = vmatmul.bf16.gmra.mxu0 %v1785
    %v2084 = vpop.f32.mrf.mxu0
    %v2085 = vadd.f32 %v2071, %v2084
    %v2086 = vpop.f32.mrf.mxu0
    %v2087 = vadd.f32 %v2073, %v2086
    %2088 = vdwg.mxu0
    %2089 = vmatpush.bf16.msra.mxu0 %v2014
    %2090 = vmatpush.bf16.msra.mxu0 %v2013
    %2091 = vmatpush.bf16.msra.mxu0 %v2012
    %2092 = vmatpush.bf16.msra.mxu0 %v2011
    %2093 = vmatpush.bf16.msra.mxu0 %v2010
    %2094 = vmatpush.bf16.msra.mxu0 %v2009
    %2095 = vmatpush.bf16.msra.mxu0 %v2008
    %2096 = vmatpush.bf16.msra.mxu0 %v2007
    %2097 = vmatmul.bf16.gmra.mxu0 %v1786
    %v2098 = vpop.f32.mrf.mxu0
    %v2099 = vadd.f32 %v2085, %v2098
    %v2100 = vpop.f32.mrf.mxu0
    %v2101 = vadd.f32 %v2087, %v2100
    %2102 = vdwg.mxu0
    %v2103 = vld [vmem:[%s7] sm:$0x1]
    %v2104 = vld [vmem:[%s8] sm:$0x1]
    %2105 = vadd.xlane.f32.xlu0 %v2099
    %v2106 = vpop.xlane.xlu0 %2105
    %2107 = vadd.xlane.f32.xlu0 %v2101
    %v2108 = vpop.xlane.xlu0 %2107
    %v2109 = vrcp.pop 128.0
    %v2110 = vmul.f32 128.0, %v2109
    %v2111 = vsub.f32 1.0, %v2110
    %v2112 = vmul.f32 %v2109, %v2111
    %v2113 = vadd.f32 %v2109, %v2112
    %vm2114 = vweird.f32 %v2109
    %v2115 = vsel %vm2114, %v2109, %v2113
    %v2116 = vmul.f32 %v2106, %v2115
    %v2117 = vmul.f32 %v2108, %v2115
    %v2118 = vmul.f32 %v2099, %v2099
    %v2119 = vmul.f32 %v2101, %v2101
    %2120 = vadd.xlane.f32.xlu0 %v2118
    %v2121 = vpop.xlane.xlu0 %2120
    %2122 = vadd.xlane.f32.xlu0 %v2119
    %v2123 = vpop.xlane.xlu0 %2122
    %v2124 = vmul.f32 %v2121, %v2115
    %v2125 = vmul.f32 %v2123, %v2115
    %v2126 = vmul.f32 %v2116, %v2116
    %v2127 = vmul.f32 %v2117, %v2117
    %v2128 = vsub.f32 %v2124, %v2126
    %v2129 = vsub.f32 %v2125, %v2127
    %v2130 = vsub.f32 %v2099, %v2116
    %v2131 = vsub.f32 %v2101, %v2117
    %v2132 = vadd.f32 %v2128, 1e-05
    %v2133 = vadd.f32 %v2129, 1e-05
    %v2134 = vrsqrt.pop %v2132
    %v2135 = vmul.f32 %v2134, %v2132
    %v2136 = vmul.f32 %v2135, %v2134
    %v2137 = vmul.f32 0.5, %v2136
    %v2138 = vsub.f32 1.5, %v2137
    %v2139 = vmul.f32 %v2134, %v2138
    %vm2140 = vweird.f32 %v2132
    %vm2141 = vweird.f32 %v2134
    %vm2142 = vmor %vm2140, %vm2141
    %v2143 = vsel %vm2142, %v2134, %v2139
    %v2144 = vrsqrt.pop %v2133
    %v2145 = vmul.f32 %v2144, %v2133
    %v2146 = vmul.f32 %v2145, %v2144
    %v2147 = vmul.f32 0.5, %v2146
    %v2148 = vsub.f32 1.5, %v2147
    %v2149 = vmul.f32 %v2144, %v2148
    %vm2150 = vweird.f32 %v2133
    %vm2151 = vweird.f32 %v2144
    %vm2152 = vmor %vm2150, %vm2151
    %v2153 = vsel %vm2152, %v2144, %v2149
    %v2154 = vmul.f32 %v2130, %v2143
    %v2155 = vmul.f32 %v2131, %v2153
    %v2157 = vperm.slane %v2103, 0
    %v2159 = vmul.f32 %v2154, %v2157
    %v2160 = vmul.f32 %v2155, %v2157
    %v2162 = vperm.slane %v2104, 0
    %v2164 = vadd.f32 %v2159, %v2162
    %v2165 = vadd.f32 %v2160, %v2162
    %v2166 = vmax.f32 %v2164, 0.0
    %v2167 = vmax.f32 %v2165, 0.0
    %v2168 = vpack.c.bf16 %v2167, %v2166
    %v2169 = vld [vmem:[%s9] sm:$0xf]
    %v2170 = vld [vmem:[%s9 + $0x4] sm:$0xf]
    %v2171 = vld [vmem:[%s9 + $0x8] sm:$0xf]
    %v2172 = vld [vmem:[%s9 + $0xc] sm:$0xf]
    %v2173 = vld [vmem:[%s9 + $0x10] sm:$0xf]
    %v2174 = vld [vmem:[%s9 + $0x14] sm:$0xf]
    %v2175 = vld [vmem:[%s9 + $0x18] sm:$0xf]
    %v2176 = vld [vmem:[%s9 + $0x1c] sm:$0xf]
    %v2177 = vld [vmem:[%s9 + $0x20] sm:$0xf]
    %v2178 = vld [vmem:[%s9 + $0x24] sm:$0xf]
    %v2179 = vld [vmem:[%s9 + $0x28] sm:$0xf]
    %v2180 = vld [vmem:[%s9 + $0x2c] sm:$0xf]
    %v2181 = vld [vmem:[%s9 + $0x30] sm:$0xf]
    %v2182 = vld [vmem:[%s9 + $0x34] sm:$0xf]
    %v2183 = vld [vmem:[%s9 + $0x38] sm:$0xf]
    %v2184 = vld [vmem:[%s9 + $0x3c] sm:$0xf]
    %v2185 = vld [vmem:[%s10] sm:$0x1]
    %v2187 = vperm.slane %v2185, 0
    %v2205 = vunpack.c.l.b16 %v2169
    %v2206 = vunpack.c.l.b16 %v2170
    %v2207 = vunpack.c.l.b16 %v2171
    %v2208 = vunpack.c.l.b16 %v2172
    %v2209 = vunpack.c.l.b16 %v2173
    %v2210 = vunpack.c.l.b16 %v2174
    %v2211 = vunpack.c.l.b16 %v2175
    %v2212 = vunpack.c.l.b16 %v2176
    %v2213 = vunpack.c.l.b16 %v2177
    %v2214 = vunpack.c.l.b16 %v2178
    %v2215 = vunpack.c.l.b16 %v2179
    %v2216 = vunpack.c.l.b16 %v2180
    %v2217 = vunpack.c.l.b16 %v2181
    %v2218 = vunpack.c.l.b16 %v2182
    %v2219 = vunpack.c.l.b16 %v2183
    %v2220 = vunpack.c.l.b16 %v2184
    %v2221 = vpack.c.b16 %v2206, %v2205
    %v2222 = vpack.c.b16 %v2208, %v2207
    %v2223 = vpack.c.b16 %v2210, %v2209
    %v2224 = vpack.c.b16 %v2212, %v2211
    %v2225 = vpack.c.b16 %v2214, %v2213
    %v2226 = vpack.c.b16 %v2216, %v2215
    %v2227 = vpack.c.b16 %v2218, %v2217
    %v2228 = vpack.c.b16 %v2220, %v2219
    %2237 = vmatpush.bf16.msra.mxu0 %v2228
    %2238 = vmatpush.bf16.msra.mxu0 %v2227
    %2239 = vmatpush.bf16.msra.mxu0 %v2226
    %2240 = vmatpush.bf16.msra.mxu0 %v2225
    %2241 = vmatpush.bf16.msra.mxu0 %v2224
    %2242 = vmatpush.bf16.msra.mxu0 %v2223
    %2243 = vmatpush.bf16.msra.mxu0 %v2222
    %2244 = vmatpush.bf16.msra.mxu0 %v2221
    %2245 = vmatmul.bf16.gmra.mxu0 %v2168
    %v2246 = vpop.f32.mrf.mxu0
    %v2247 = vadd.f32 %v2187, %v2246
    %v2248 = vpop.f32.mrf.mxu0
    %v2249 = vadd.f32 %v2187, %v2248
    %2250 = vdwg.mxu0
    %v2251 = vpack.c.bf16 %v2247, %v2247
    %v2252 = vpack.c.bf16 %v2249, %v2249
    %2253 = vst [vmem:[%s11] sm:$0xf] %v2251
    %2254 = vst [vmem:[%s11 + $0x4] sm:$0xf] %v2252
    // Predicated region
    $region50: #{mlp_forward.1} parent=1 // pred_check
      _
    $region51: #{mlp_forward.1} parent=1 // pred_check_branch
      %2256 = sbr.rel (0) target = $region53
    $region52: #{mlp_forward.1} parent=1 // pred_region
      _
    $region53: #{mlp_forward.1} parent=1 // pred_fallthru
      _
    // Predicated region
    $region54: #{mlp_forward.1} parent=1 // pred_check
      _
    $region55: #{mlp_forward.1} parent=1 // pred_check_branch
      %2258 = sbr.rel (0) target = $region57
    $region56: #{mlp_forward.1} parent=1 // pred_region
      _
    $region57: #{mlp_forward.1} parent=1 // pred_fallthru
      _
    %2259 = vsyncpa [#allocation3], 1

</llo_original>
